<compile_context>
chip_gen: v6e
topology: v6e:2x2x1
jax: 0.10.0
libtpu: 0.0.40
codegen_flags: <defaults>
</compile_context>

<pallas_src>
import math
import functools

import numpy as np
import jax
import jax.numpy as jnp
from jax import lax
from jax.experimental import pallas as pl
from jax.experimental.pallas import tpu as pltpu


# --------------------------------------------------------------------------
# Fused kernel (channels-major), one grid step covers `batch_per_step` images.
#   x_ref : (batch_per_step, C, L) f32   (NCHW reshaped; channels on sublanes)
#   w1_ref: (3C, C) bf16   rows = [q | k | v], each in (head, head_dim) order,
#                          pre-transposed; 1/sqrt(D) folded into the q rows.
#   b1_ref: (3C, 1) f32    same permutation / scaling.
#   w2_ref: (C, C)  bf16   pre-transposed + row-permuted so the kernel's
#                          (head, head_dim) sublane stacking matches l2.
#   b2_ref: (C, 1)  f32
#   o_ref : (batch_per_step, C, L) f32   (channels-major -> wrapper reshape to
#                          NCHW is free)
# --------------------------------------------------------------------------
def _fused_attn_kernel(x_ref, w1_ref, b1_ref, w2_ref, b2_ref, o_ref, *,
                       num_heads, batch_per_step):
    C = w1_ref.shape[1]
    D = C // num_heads

    w1 = w1_ref[...]                                   # (3C, C) bf16
    b1 = b1_ref[...]                                   # (3C, 1) f32
    w2 = w2_ref[...]                                   # (C, C)  bf16
    b2 = b2_ref[...]                                   # (C, 1)  f32

    for b in range(batch_per_step):                    # static unroll (<= 2)
        x_cl = x_ref[b].astype(jnp.bfloat16)           # (C, L)

        # l1, channels-major: yT = W1^T x + b1  -> (3C, L), f32 accumulation.
        yT = jnp.dot(w1, x_cl, preferred_element_type=jnp.float32) + b1

        # TODO(synk): scaled_dot_product_attention uses dropout_p=0.1
        # (stochastic); omitted for a deterministic (inference) kernel.
        head_outs = []
        for h in range(num_heads):                     # static unroll, H = 4
            qT = yT[h * D:(h + 1) * D, :]              # (D, L) scale pre-folded
            kT = yT[C + h * D:C + (h + 1) * D, :]      # (D, L)
            vT = yT[2 * C + h * D:2 * C + (h + 1) * D, :]

            # scores with keys on sublanes, queries on lanes:
            #   sT[j, i] = sum_d k[j, d] * (q[i, d] / sqrt(D))
            k_ld = kT.T                                # (L, D) tiny XLU transpose
            sT = jnp.dot(k_ld.astype(jnp.bfloat16), qT.astype(jnp.bfloat16),
                         preferred_element_type=jnp.float32)   # (L_k, L_q)

            # softmax over keys (sublane axis) in f32; normalization deferred.
            m = jnp.max(sT, axis=0, keepdims=True)     # (1, L_q)
            p = jnp.exp(sT - m)                        # (L_k, L_q)
            denom = jnp.sum(p, axis=0, keepdims=True)  # (1, L_q)

            # o_hT[d, i] = sum_j v[j, d] * p[j, i]   (standard MXU matmul)
            o_hT = jnp.dot(vT.astype(jnp.bfloat16), p.astype(jnp.bfloat16),
                           preferred_element_type=jnp.float32)  # (D, L_q)
            head_outs.append(o_hT * (1.0 / denom))     # exact reciprocal

        # stack heads along sublanes in (head, head_dim) order -> (C, L);
        # the 'b H L C -> b L (C H)' reorder is folded into the w2 permutation.
        o_cl = jnp.concatenate(head_outs, axis=0)

        # l2, channels-major: out = W2^T o + b2 -> (C, L), written directly.
        out = jnp.dot(w2, o_cl.astype(jnp.bfloat16),
                      preferred_element_type=jnp.float32) + b2
        o_ref[b] = out.astype(o_ref.dtype)


def _batch_per_step(batch):
    """v7x has 2 TensorCores -> one batch element per (parallel) grid step.
    Single-TC chips (v2..v6e) -> merge the whole batch into one grid step."""
    try:
        kind = jax.devices()[0].device_kind.lower()
    except Exception:
        kind = ""
    if "v7" in kind and batch % 2 == 0:
        return 1
    return batch


def attention_forward(x, prepared, num_heads, batch_per_step):
    """x: (B, C, H, W) f32. prepared: pre-permuted params from prepare_params."""
    w1p, b1p, w2p, b2p = prepared
    B, C, H, W = x.shape
    L = H * W
    D = C // num_heads
    num_steps = B // batch_per_step

    x_bcl = x.reshape(B, C, L)            # free reshape (no transpose)

    cost = pl.CostEstimate(
        flops=2 * B * (L * C * 3 * C + 2 * num_heads * L * L * D + L * C * C),
        transcendentals=B * num_heads * L * L,
        bytes_accessed=(2 * 4 * B * C * L              # x in + out (f32)
                        + 2 * (3 * C * C + C * C)      # bf16 weights
                        + 4 * (3 * C + C)))            # f32 biases

    out = pl.pallas_call(
        functools.partial(_fused_attn_kernel, num_heads=num_heads,
                          batch_per_step=batch_per_step),
        out_shape=jax.ShapeDtypeStruct((B, C, L), jnp.float32),
        grid=(num_steps,),
        in_specs=[
            pl.BlockSpec((batch_per_step, C, L), lambda b: (b, 0, 0)),
            pl.BlockSpec((3 * C, C), lambda b: (0, 0)),
            pl.BlockSpec((3 * C, 1), lambda b: (0, 0)),
            pl.BlockSpec((C, C), lambda b: (0, 0)),
            pl.BlockSpec((C, 1), lambda b: (0, 0)),
        ],
        out_specs=pl.BlockSpec((batch_per_step, C, L), lambda b: (b, 0, 0)),
        compiler_params=pltpu.CompilerParams(
            dimension_semantics=("parallel",)),
        cost_estimate=cost,
    )(x_bcl, w1p, b1p, w2p, b2p)

    return out.reshape(B, C, H, W)        # free reshape (channels already major)


# --------------------------------------------------------------------------
# One-time host-side parameter preparation:
#  * permute w1/b1 columns so 'b L (C H K) -> K b H L C' becomes contiguous
#    [q | k | v] sections, each ordered (head, head_dim), then transpose to
#    (3C, C) for the channels-major in-kernel matmul,
#  * fold 1/sqrt(head_dim) into the q rows of w1/b1,
#  * permute + transpose w2 so the kernel's (head, head_dim) sublane stacking
#    matches the 'b H (h w) C -> b h w (C H)' feature order expected by l2,
#  * cast weight matrices to bf16 for the MXU (biases stay f32, as columns).
# --------------------------------------------------------------------------
def prepare_params(params, num_heads):
    C = params["w2"].shape[0]
    D = C // num_heads
    H = num_heads
    scale = 1.0 / math.sqrt(D)

    # torch l1 output feature j = d*(H*3) + h*3 + kqv   (einops '(C H K)')
    perm = np.array([d * (H * 3) + h * 3 + kqv
                     for kqv in range(3)
                     for h in range(H)
                     for d in range(D)], dtype=np.int32)
    w1 = np.array(params["w1"])[:, perm]                 # (C, 3C), new copy
    b1 = np.array(params["b1"])[perm]                    # (3C,)
    w1[:, :C] *= scale                                   # fold attention scale
    b1[:C] *= scale
    w1pT = jnp.asarray(w1.T, dtype=jnp.bfloat16)         # (3C, C)
    b1pT = jnp.asarray(b1.reshape(3 * C, 1), dtype=jnp.float32)

    # l2 input feature i = d*H + h  (einops '(C H)'); kernel supplies h*D + d.
    rperm = np.array([d * H + h
                      for h in range(H)
                      for d in range(D)], dtype=np.int32)
    w2pT = jnp.asarray(np.array(params["w2"])[rperm, :].T, dtype=jnp.bfloat16)  # (C, C)
    b2pT = jnp.asarray(np.array(params["b2"]).reshape(C, 1), dtype=jnp.float32)
    return w1pT, b1pT, w2pT, b2pT


# --------------------------------------------------------------------------
# Pure-JAX f32 reference (same math as the PyTorch module, un-permuted params).
# --------------------------------------------------------------------------
def attention_forward_ref(x, params, num_heads):
    B, C, H, W = x.shape
    L = H * W
    D = C // num_heads
    w1, b1, w2, b2 = params["w1"], params["b1"], params["w2"], params["b2"]
    xl = jnp.transpose(x.reshape(B, C, L), (0, 2, 1))
    y = xl @ w1 + b1
    y = y.reshape(B, L, D, num_heads, 3)
    y = jnp.transpose(y, (4, 0, 3, 1, 2))
    q, k, v = y[0], y[1], y[2]
    s = jnp.einsum("bhqd,bhkd->bhqk", q, k) / math.sqrt(D)
    p = jax.nn.softmax(s, axis=-1)
    o = jnp.einsum("bhqk,bhkd->bhqd", p, v)
    o = o.reshape(B, num_heads, H, W, D)
    o = jnp.transpose(o, (0, 2, 3, 4, 1)).reshape(B, H, W, C)
    o = o @ w2 + b2
    return jnp.transpose(o, (0, 3, 1, 2))


if __name__ == "__main__":
    # batch=2, num_channels=32, num_heads=4, spatial 8x8 -> L=64, head_dim=8
    B, C, Hs, Ws = 2, 32, 8, 8
    num_heads = 4

    key = jax.random.PRNGKey(0)
    kx, k1, k2, k3, k4 = jax.random.split(key, 5)

    x = jax.random.normal(kx, (B, C, Hs, Ws), dtype=jnp.float32)

    # Deterministic synthetic parameters (torch nn.Linear shapes, stored transposed).
    bound1 = 1.0 / math.sqrt(C)
    params = {
        "w1": jax.random.uniform(k1, (C, 3 * C), jnp.float32, -bound1, bound1),
        "b1": jax.random.uniform(k2, (3 * C,), jnp.float32, -bound1, bound1),
        "w2": jax.random.uniform(k3, (C, C), jnp.float32, -bound1, bound1),
        "b2": jax.random.uniform(k4, (C,), jnp.float32, -bound1, bound1),
    }

    prepared = prepare_params(params, num_heads)
    bps = _batch_per_step(B)

    fwd = jax.jit(functools.partial(attention_forward, num_heads=num_heads,
                                    batch_per_step=bps))
    out = jax.block_until_ready(fwd(x, prepared))

    ref = attention_forward_ref(x, params, num_heads)
    assert out.shape == (B, C, Hs, Ws)
    # Tolerance reflects bf16 MXU operands vs. the pure-f32 reference.
    assert jnp.allclose(out, ref, atol=5e-2, rtol=5e-2), "mismatch vs reference"

    print("KERNEL_OK")
</pallas_src>

<mosaic_0001>
module attributes {stable_mosaic.version = 11 : i64} {
  func.func @_fused_attn_kernel(%arg0: i32, %arg1: memref<2x32x64xf32, #tpu.memory_space<vmem>>, %arg2: memref<96x32xbf16, #tpu.memory_space<vmem>>, %arg3: memref<96x1xf32, #tpu.memory_space<vmem>>, %arg4: memref<32x32xbf16, #tpu.memory_space<vmem>>, %arg5: memref<32x1xf32, #tpu.memory_space<vmem>>, %arg6: memref<2x32x64xf32, #tpu.memory_space<vmem>>) attributes {dimension_semantics = [#tpu.dimension_semantics<parallel>], iteration_bounds = array<i64: 1>, scalar_prefetch = 0 : i64, scratch_operands = 0 : i64, tpu.core_type = #tpu.core_type<tc>, window_params = [{transform_indices = @transform_0, window_bounds = array<i64: 2, 32, 64>}, {pipeline_mode = #tpu.pipeline_mode<synchronous>, transform_indices = @transform_1, window_bounds = array<i64: 96, 32>}, {pipeline_mode = #tpu.pipeline_mode<synchronous>, transform_indices = @transform_2, window_bounds = array<i64: 96, 1>}, {pipeline_mode = #tpu.pipeline_mode<synchronous>, transform_indices = @transform_3, window_bounds = array<i64: 32, 32>}, {pipeline_mode = #tpu.pipeline_mode<synchronous>, transform_indices = @transform_4, window_bounds = array<i64: 32, 1>}, {transform_indices = @transform_5, window_bounds = array<i64: 2, 32, 64>}]} {
    %c0 = arith.constant 0 : index
    %c0_0 = arith.constant 0 : index
    %0 = vector.load %arg2[%c0, %c0_0] : memref<96x32xbf16, #tpu.memory_space<vmem>>, vector<96x32xbf16>
    %c0_1 = arith.constant 0 : index
    %c0_2 = arith.constant 0 : index
    %1 = vector.load %arg3[%c0_1, %c0_2] : memref<96x1xf32, #tpu.memory_space<vmem>>, vector<96x1xf32>
    %c0_3 = arith.constant 0 : index
    %c0_4 = arith.constant 0 : index
    %2 = vector.load %arg4[%c0_3, %c0_4] : memref<32x32xbf16, #tpu.memory_space<vmem>>, vector<32x32xbf16>
    %c0_5 = arith.constant 0 : index
    %c0_6 = arith.constant 0 : index
    %3 = vector.load %arg5[%c0_5, %c0_6] : memref<32x1xf32, #tpu.memory_space<vmem>>, vector<32x1xf32>
    %c0_7 = arith.constant 0 : index
    %c0_8 = arith.constant 0 : index
    %c0_9 = arith.constant 0 : index
    %4 = vector.load %arg1[%c0_7, %c0_8, %c0_9] : memref<2x32x64xf32, #tpu.memory_space<vmem>>, vector<1x32x64xf32>
    %5 = vector.shape_cast %4 : vector<1x32x64xf32> to vector<32x64xf32>
    %6 = arith.truncf %5 : vector<32x64xf32> to vector<32x64xbf16>
    %cst = arith.constant dense<0.000000e+00> : vector<96x64xf32>
    %7 = tpu.matmul %0, %6, %cst {dimension_numbers = #tpu.dot_dimension_numbers<[1], [0], [0], [1], [0, 0, 1, 1], [], []>} : vector<96x32xbf16>, vector<32x64xbf16>, vector<96x64xf32> -> vector<96x64xf32>
    %8 = vector.broadcast %1 : vector<96x1xf32> to vector<96x64xf32>
    %9 = arith.addf %7, %8 : vector<96x64xf32>
    %10 = vector.extract_strided_slice %9 {offsets = [0, 0], sizes = [8, 64], strides = [1, 1]} : vector<96x64xf32> to vector<8x64xf32>
    %11 = vector.extract_strided_slice %9 {offsets = [32, 0], sizes = [8, 64], strides = [1, 1]} : vector<96x64xf32> to vector<8x64xf32>
    %12 = vector.extract_strided_slice %9 {offsets = [64, 0], sizes = [8, 64], strides = [1, 1]} : vector<96x64xf32> to vector<8x64xf32>
    %13 = tpu.transpose %11, [1, 0] : vector<8x64xf32> -> vector<64x8xf32>
    %14 = arith.truncf %13 : vector<64x8xf32> to vector<64x8xbf16>
    %15 = arith.truncf %10 : vector<8x64xf32> to vector<8x64xbf16>
    %cst_10 = arith.constant dense<0.000000e+00> : vector<64x64xf32>
    %16 = tpu.matmul %14, %15, %cst_10 {dimension_numbers = #tpu.dot_dimension_numbers<[1], [0], [0], [1], [0, 0, 1, 1], [], []>} : vector<64x8xbf16>, vector<8x64xbf16>, vector<64x64xf32> -> vector<64x64xf32>
    %cst_11 = arith.constant dense<0xFF800000> : vector<64xf32>
    %17 = vector.multi_reduction <maximumf>, %16, %cst_11 [0] : vector<64x64xf32> to vector<64xf32>
    %18 = vector.shape_cast %17 : vector<64xf32> to vector<1x64xf32>
    %19 = vector.broadcast %18 : vector<1x64xf32> to vector<64x64xf32>
    %20 = arith.subf %16, %19 : vector<64x64xf32>
    %21 = math.exp %20 : vector<64x64xf32>
    %cst_12 = arith.constant dense<0.000000e+00> : vector<64xf32>
    %22 = vector.multi_reduction <add>, %21, %cst_12 [0] : vector<64x64xf32> to vector<64xf32>
    %23 = vector.shape_cast %22 : vector<64xf32> to vector<1x64xf32>
    %24 = arith.truncf %12 : vector<8x64xf32> to vector<8x64xbf16>
    %25 = arith.truncf %21 : vector<64x64xf32> to vector<64x64xbf16>
    %cst_13 = arith.constant dense<0.000000e+00> : vector<8x64xf32>
    %26 = tpu.matmul %24, %25, %cst_13 {dimension_numbers = #tpu.dot_dimension_numbers<[1], [0], [0], [1], [0, 0, 1, 1], [], []>} : vector<8x64xbf16>, vector<64x64xbf16>, vector<8x64xf32> -> vector<8x64xf32>
    %cst_14 = arith.constant 1.000000e+00 : f32
    %27 = vector.broadcast %cst_14 : f32 to vector<1x64xf32>
    %28 = arith.divf %27, %23 : vector<1x64xf32>
    %29 = vector.broadcast %28 : vector<1x64xf32> to vector<8x64xf32>
    %30 = arith.mulf %26, %29 : vector<8x64xf32>
    %31 = vector.extract_strided_slice %9 {offsets = [8, 0], sizes = [8, 64], strides = [1, 1]} : vector<96x64xf32> to vector<8x64xf32>
    %32 = vector.extract_strided_slice %9 {offsets = [40, 0], sizes = [8, 64], strides = [1, 1]} : vector<96x64xf32> to vector<8x64xf32>
    %33 = vector.extract_strided_slice %9 {offsets = [72, 0], sizes = [8, 64], strides = [1, 1]} : vector<96x64xf32> to vector<8x64xf32>
    %34 = tpu.transpose %32, [1, 0] : vector<8x64xf32> -> vector<64x8xf32>
    %35 = arith.truncf %34 : vector<64x8xf32> to vector<64x8xbf16>
    %36 = arith.truncf %31 : vector<8x64xf32> to vector<8x64xbf16>
    %cst_15 = arith.constant dense<0.000000e+00> : vector<64x64xf32>
    %37 = tpu.matmul %35, %36, %cst_15 {dimension_numbers = #tpu.dot_dimension_numbers<[1], [0], [0], [1], [0, 0, 1, 1], [], []>} : vector<64x8xbf16>, vector<8x64xbf16>, vector<64x64xf32> -> vector<64x64xf32>
    %cst_16 = arith.constant dense<0xFF800000> : vector<64xf32>
    %38 = vector.multi_reduction <maximumf>, %37, %cst_16 [0] : vector<64x64xf32> to vector<64xf32>
    %39 = vector.shape_cast %38 : vector<64xf32> to vector<1x64xf32>
    %40 = vector.broadcast %39 : vector<1x64xf32> to vector<64x64xf32>
    %41 = arith.subf %37, %40 : vector<64x64xf32>
    %42 = math.exp %41 : vector<64x64xf32>
    %cst_17 = arith.constant dense<0.000000e+00> : vector<64xf32>
    %43 = vector.multi_reduction <add>, %42, %cst_17 [0] : vector<64x64xf32> to vector<64xf32>
    %44 = vector.shape_cast %43 : vector<64xf32> to vector<1x64xf32>
    %45 = arith.truncf %33 : vector<8x64xf32> to vector<8x64xbf16>
    %46 = arith.truncf %42 : vector<64x64xf32> to vector<64x64xbf16>
    %cst_18 = arith.constant dense<0.000000e+00> : vector<8x64xf32>
    %47 = tpu.matmul %45, %46, %cst_18 {dimension_numbers = #tpu.dot_dimension_numbers<[1], [0], [0], [1], [0, 0, 1, 1], [], []>} : vector<8x64xbf16>, vector<64x64xbf16>, vector<8x64xf32> -> vector<8x64xf32>
    %cst_19 = arith.constant 1.000000e+00 : f32
    %48 = vector.broadcast %cst_19 : f32 to vector<1x64xf32>
    %49 = arith.divf %48, %44 : vector<1x64xf32>
    %50 = vector.broadcast %49 : vector<1x64xf32> to vector<8x64xf32>
    %51 = arith.mulf %47, %50 : vector<8x64xf32>
    %52 = vector.extract_strided_slice %9 {offsets = [16, 0], sizes = [8, 64], strides = [1, 1]} : vector<96x64xf32> to vector<8x64xf32>
    %53 = vector.extract_strided_slice %9 {offsets = [48, 0], sizes = [8, 64], strides = [1, 1]} : vector<96x64xf32> to vector<8x64xf32>
    %54 = vector.extract_strided_slice %9 {offsets = [80, 0], sizes = [8, 64], strides = [1, 1]} : vector<96x64xf32> to vector<8x64xf32>
    %55 = tpu.transpose %53, [1, 0] : vector<8x64xf32> -> vector<64x8xf32>
    %56 = arith.truncf %55 : vector<64x8xf32> to vector<64x8xbf16>
    %57 = arith.truncf %52 : vector<8x64xf32> to vector<8x64xbf16>
    %cst_20 = arith.constant dense<0.000000e+00> : vector<64x64xf32>
    %58 = tpu.matmul %56, %57, %cst_20 {dimension_numbers = #tpu.dot_dimension_numbers<[1], [0], [0], [1], [0, 0, 1, 1], [], []>} : vector<64x8xbf16>, vector<8x64xbf16>, vector<64x64xf32> -> vector<64x64xf32>
    %cst_21 = arith.constant dense<0xFF800000> : vector<64xf32>
    %59 = vector.multi_reduction <maximumf>, %58, %cst_21 [0] : vector<64x64xf32> to vector<64xf32>
    %60 = vector.shape_cast %59 : vector<64xf32> to vector<1x64xf32>
    %61 = vector.broadcast %60 : vector<1x64xf32> to vector<64x64xf32>
    %62 = arith.subf %58, %61 : vector<64x64xf32>
    %63 = math.exp %62 : vector<64x64xf32>
    %cst_22 = arith.constant dense<0.000000e+00> : vector<64xf32>
    %64 = vector.multi_reduction <add>, %63, %cst_22 [0] : vector<64x64xf32> to vector<64xf32>
    %65 = vector.shape_cast %64 : vector<64xf32> to vector<1x64xf32>
    %66 = arith.truncf %54 : vector<8x64xf32> to vector<8x64xbf16>
    %67 = arith.truncf %63 : vector<64x64xf32> to vector<64x64xbf16>
    %cst_23 = arith.constant dense<0.000000e+00> : vector<8x64xf32>
    %68 = tpu.matmul %66, %67, %cst_23 {dimension_numbers = #tpu.dot_dimension_numbers<[1], [0], [0], [1], [0, 0, 1, 1], [], []>} : vector<8x64xbf16>, vector<64x64xbf16>, vector<8x64xf32> -> vector<8x64xf32>
    %cst_24 = arith.constant 1.000000e+00 : f32
    %69 = vector.broadcast %cst_24 : f32 to vector<1x64xf32>
    %70 = arith.divf %69, %65 : vector<1x64xf32>
    %71 = vector.broadcast %70 : vector<1x64xf32> to vector<8x64xf32>
    %72 = arith.mulf %68, %71 : vector<8x64xf32>
    %73 = vector.extract_strided_slice %9 {offsets = [24, 0], sizes = [8, 64], strides = [1, 1]} : vector<96x64xf32> to vector<8x64xf32>
    %74 = vector.extract_strided_slice %9 {offsets = [56, 0], sizes = [8, 64], strides = [1, 1]} : vector<96x64xf32> to vector<8x64xf32>
    %75 = vector.extract_strided_slice %9 {offsets = [88, 0], sizes = [8, 64], strides = [1, 1]} : vector<96x64xf32> to vector<8x64xf32>
    %76 = tpu.transpose %74, [1, 0] : vector<8x64xf32> -> vector<64x8xf32>
    %77 = arith.truncf %76 : vector<64x8xf32> to vector<64x8xbf16>
    %78 = arith.truncf %73 : vector<8x64xf32> to vector<8x64xbf16>
    %cst_25 = arith.constant dense<0.000000e+00> : vector<64x64xf32>
    %79 = tpu.matmul %77, %78, %cst_25 {dimension_numbers = #tpu.dot_dimension_numbers<[1], [0], [0], [1], [0, 0, 1, 1], [], []>} : vector<64x8xbf16>, vector<8x64xbf16>, vector<64x64xf32> -> vector<64x64xf32>
    %cst_26 = arith.constant dense<0xFF800000> : vector<64xf32>
    %80 = vector.multi_reduction <maximumf>, %79, %cst_26 [0] : vector<64x64xf32> to vector<64xf32>
    %81 = vector.shape_cast %80 : vector<64xf32> to vector<1x64xf32>
    %82 = vector.broadcast %81 : vector<1x64xf32> to vector<64x64xf32>
    %83 = arith.subf %79, %82 : vector<64x64xf32>
    %84 = math.exp %83 : vector<64x64xf32>
    %cst_27 = arith.constant dense<0.000000e+00> : vector<64xf32>
    %85 = vector.multi_reduction <add>, %84, %cst_27 [0] : vector<64x64xf32> to vector<64xf32>
    %86 = vector.shape_cast %85 : vector<64xf32> to vector<1x64xf32>
    %87 = arith.truncf %75 : vector<8x64xf32> to vector<8x64xbf16>
    %88 = arith.truncf %84 : vector<64x64xf32> to vector<64x64xbf16>
    %cst_28 = arith.constant dense<0.000000e+00> : vector<8x64xf32>
    %89 = tpu.matmul %87, %88, %cst_28 {dimension_numbers = #tpu.dot_dimension_numbers<[1], [0], [0], [1], [0, 0, 1, 1], [], []>} : vector<8x64xbf16>, vector<64x64xbf16>, vector<8x64xf32> -> vector<8x64xf32>
    %cst_29 = arith.constant 1.000000e+00 : f32
    %90 = vector.broadcast %cst_29 : f32 to vector<1x64xf32>
    %91 = arith.divf %90, %86 : vector<1x64xf32>
    %92 = vector.broadcast %91 : vector<1x64xf32> to vector<8x64xf32>
    %93 = arith.mulf %89, %92 : vector<8x64xf32>
    %94 = tpu.concatenate %30, %51, %72, %93 in 0 : vector<8x64xf32>, vector<8x64xf32>, vector<8x64xf32>, vector<8x64xf32> -> vector<32x64xf32>
    %95 = arith.truncf %94 : vector<32x64xf32> to vector<32x64xbf16>
    %cst_30 = arith.constant dense<0.000000e+00> : vector<32x64xf32>
    %96 = tpu.matmul %2, %95, %cst_30 {dimension_numbers = #tpu.dot_dimension_numbers<[1], [0], [0], [1], [0, 0, 1, 1], [], []>} : vector<32x32xbf16>, vector<32x64xbf16>, vector<32x64xf32> -> vector<32x64xf32>
    %97 = vector.broadcast %3 : vector<32x1xf32> to vector<32x64xf32>
    %98 = arith.addf %96, %97 : vector<32x64xf32>
    %c0_31 = arith.constant 0 : index
    %c0_32 = arith.constant 0 : index
    %c0_33 = arith.constant 0 : index
    %99 = vector.load %arg6[%c0_31, %c0_32, %c0_33] : memref<2x32x64xf32, #tpu.memory_space<vmem>>, vector<1x32x64xf32>
    %100 = vector.shape_cast %99 : vector<1x32x64xf32> to vector<32x64xf32>
    %101 = vector.shape_cast %98 : vector<32x64xf32> to vector<1x32x64xf32>
    tpu.vector_store %arg6[%c0_31, %c0_32, %c0_33], %101 {strides = array<i32>} : memref<2x32x64xf32, #tpu.memory_space<vmem>>, vector<1x32x64xf32>,
    %c1 = arith.constant 1 : index
    %c0_34 = arith.constant 0 : index
    %c0_35 = arith.constant 0 : index
    %102 = vector.load %arg1[%c1, %c0_34, %c0_35] : memref<2x32x64xf32, #tpu.memory_space<vmem>>, vector<1x32x64xf32>
    %103 = vector.shape_cast %102 : vector<1x32x64xf32> to vector<32x64xf32>
    %104 = arith.truncf %103 : vector<32x64xf32> to vector<32x64xbf16>
    %cst_36 = arith.constant dense<0.000000e+00> : vector<96x64xf32>
    %105 = tpu.matmul %0, %104, %cst_36 {dimension_numbers = #tpu.dot_dimension_numbers<[1], [0], [0], [1], [0, 0, 1, 1], [], []>} : vector<96x32xbf16>, vector<32x64xbf16>, vector<96x64xf32> -> vector<96x64xf32>
    %106 = vector.broadcast %1 : vector<96x1xf32> to vector<96x64xf32>
    %107 = arith.addf %105, %106 : vector<96x64xf32>
    %108 = vector.extract_strided_slice %107 {offsets = [0, 0], sizes = [8, 64], strides = [1, 1]} : vector<96x64xf32> to vector<8x64xf32>
    %109 = vector.extract_strided_slice %107 {offsets = [32, 0], sizes = [8, 64], strides = [1, 1]} : vector<96x64xf32> to vector<8x64xf32>
    %110 = vector.extract_strided_slice %107 {offsets = [64, 0], sizes = [8, 64], strides = [1, 1]} : vector<96x64xf32> to vector<8x64xf32>
    %111 = tpu.transpose %109, [1, 0] : vector<8x64xf32> -> vector<64x8xf32>
    %112 = arith.truncf %111 : vector<64x8xf32> to vector<64x8xbf16>
    %113 = arith.truncf %108 : vector<8x64xf32> to vector<8x64xbf16>
    %cst_37 = arith.constant dense<0.000000e+00> : vector<64x64xf32>
    %114 = tpu.matmul %112, %113, %cst_37 {dimension_numbers = #tpu.dot_dimension_numbers<[1], [0], [0], [1], [0, 0, 1, 1], [], []>} : vector<64x8xbf16>, vector<8x64xbf16>, vector<64x64xf32> -> vector<64x64xf32>
    %cst_38 = arith.constant dense<0xFF800000> : vector<64xf32>
    %115 = vector.multi_reduction <maximumf>, %114, %cst_38 [0] : vector<64x64xf32> to vector<64xf32>
    %116 = vector.shape_cast %115 : vector<64xf32> to vector<1x64xf32>
    %117 = vector.broadcast %116 : vector<1x64xf32> to vector<64x64xf32>
    %118 = arith.subf %114, %117 : vector<64x64xf32>
    %119 = math.exp %118 : vector<64x64xf32>
    %cst_39 = arith.constant dense<0.000000e+00> : vector<64xf32>
    %120 = vector.multi_reduction <add>, %119, %cst_39 [0] : vector<64x64xf32> to vector<64xf32>
    %121 = vector.shape_cast %120 : vector<64xf32> to vector<1x64xf32>
    %122 = arith.truncf %110 : vector<8x64xf32> to vector<8x64xbf16>
    %123 = arith.truncf %119 : vector<64x64xf32> to vector<64x64xbf16>
    %cst_40 = arith.constant dense<0.000000e+00> : vector<8x64xf32>
    %124 = tpu.matmul %122, %123, %cst_40 {dimension_numbers = #tpu.dot_dimension_numbers<[1], [0], [0], [1], [0, 0, 1, 1], [], []>} : vector<8x64xbf16>, vector<64x64xbf16>, vector<8x64xf32> -> vector<8x64xf32>
    %cst_41 = arith.constant 1.000000e+00 : f32
    %125 = vector.broadcast %cst_41 : f32 to vector<1x64xf32>
    %126 = arith.divf %125, %121 : vector<1x64xf32>
    %127 = vector.broadcast %126 : vector<1x64xf32> to vector<8x64xf32>
    %128 = arith.mulf %124, %127 : vector<8x64xf32>
    %129 = vector.extract_strided_slice %107 {offsets = [8, 0], sizes = [8, 64], strides = [1, 1]} : vector<96x64xf32> to vector<8x64xf32>
    %130 = vector.extract_strided_slice %107 {offsets = [40, 0], sizes = [8, 64], strides = [1, 1]} : vector<96x64xf32> to vector<8x64xf32>
    %131 = vector.extract_strided_slice %107 {offsets = [72, 0], sizes = [8, 64], strides = [1, 1]} : vector<96x64xf32> to vector<8x64xf32>
    %132 = tpu.transpose %130, [1, 0] : vector<8x64xf32> -> vector<64x8xf32>
    %133 = arith.truncf %132 : vector<64x8xf32> to vector<64x8xbf16>
    %134 = arith.truncf %129 : vector<8x64xf32> to vector<8x64xbf16>
    %cst_42 = arith.constant dense<0.000000e+00> : vector<64x64xf32>
    %135 = tpu.matmul %133, %134, %cst_42 {dimension_numbers = #tpu.dot_dimension_numbers<[1], [0], [0], [1], [0, 0, 1, 1], [], []>} : vector<64x8xbf16>, vector<8x64xbf16>, vector<64x64xf32> -> vector<64x64xf32>
    %cst_43 = arith.constant dense<0xFF800000> : vector<64xf32>
    %136 = vector.multi_reduction <maximumf>, %135, %cst_43 [0] : vector<64x64xf32> to vector<64xf32>
    %137 = vector.shape_cast %136 : vector<64xf32> to vector<1x64xf32>
    %138 = vector.broadcast %137 : vector<1x64xf32> to vector<64x64xf32>
    %139 = arith.subf %135, %138 : vector<64x64xf32>
    %140 = math.exp %139 : vector<64x64xf32>
    %cst_44 = arith.constant dense<0.000000e+00> : vector<64xf32>
    %141 = vector.multi_reduction <add>, %140, %cst_44 [0] : vector<64x64xf32> to vector<64xf32>
    %142 = vector.shape_cast %141 : vector<64xf32> to vector<1x64xf32>
    %143 = arith.truncf %131 : vector<8x64xf32> to vector<8x64xbf16>
    %144 = arith.truncf %140 : vector<64x64xf32> to vector<64x64xbf16>
    %cst_45 = arith.constant dense<0.000000e+00> : vector<8x64xf32>
    %145 = tpu.matmul %143, %144, %cst_45 {dimension_numbers = #tpu.dot_dimension_numbers<[1], [0], [0], [1], [0, 0, 1, 1], [], []>} : vector<8x64xbf16>, vector<64x64xbf16>, vector<8x64xf32> -> vector<8x64xf32>
    %cst_46 = arith.constant 1.000000e+00 : f32
    %146 = vector.broadcast %cst_46 : f32 to vector<1x64xf32>
    %147 = arith.divf %146, %142 : vector<1x64xf32>
    %148 = vector.broadcast %147 : vector<1x64xf32> to vector<8x64xf32>
    %149 = arith.mulf %145, %148 : vector<8x64xf32>
    %150 = vector.extract_strided_slice %107 {offsets = [16, 0], sizes = [8, 64], strides = [1, 1]} : vector<96x64xf32> to vector<8x64xf32>
    %151 = vector.extract_strided_slice %107 {offsets = [48, 0], sizes = [8, 64], strides = [1, 1]} : vector<96x64xf32> to vector<8x64xf32>
    %152 = vector.extract_strided_slice %107 {offsets = [80, 0], sizes = [8, 64], strides = [1, 1]} : vector<96x64xf32> to vector<8x64xf32>
    %153 = tpu.transpose %151, [1, 0] : vector<8x64xf32> -> vector<64x8xf32>
    %154 = arith.truncf %153 : vector<64x8xf32> to vector<64x8xbf16>
    %155 = arith.truncf %150 : vector<8x64xf32> to vector<8x64xbf16>
    %cst_47 = arith.constant dense<0.000000e+00> : vector<64x64xf32>
    %156 = tpu.matmul %154, %155, %cst_47 {dimension_numbers = #tpu.dot_dimension_numbers<[1], [0], [0], [1], [0, 0, 1, 1], [], []>} : vector<64x8xbf16>, vector<8x64xbf16>, vector<64x64xf32> -> vector<64x64xf32>
    %cst_48 = arith.constant dense<0xFF800000> : vector<64xf32>
    %157 = vector.multi_reduction <maximumf>, %156, %cst_48 [0] : vector<64x64xf32> to vector<64xf32>
    %158 = vector.shape_cast %157 : vector<64xf32> to vector<1x64xf32>
    %159 = vector.broadcast %158 : vector<1x64xf32> to vector<64x64xf32>
    %160 = arith.subf %156, %159 : vector<64x64xf32>
    %161 = math.exp %160 : vector<64x64xf32>
    %cst_49 = arith.constant dense<0.000000e+00> : vector<64xf32>
    %162 = vector.multi_reduction <add>, %161, %cst_49 [0] : vector<64x64xf32> to vector<64xf32>
    %163 = vector.shape_cast %162 : vector<64xf32> to vector<1x64xf32>
    %164 = arith.truncf %152 : vector<8x64xf32> to vector<8x64xbf16>
    %165 = arith.truncf %161 : vector<64x64xf32> to vector<64x64xbf16>
    %cst_50 = arith.constant dense<0.000000e+00> : vector<8x64xf32>
    %166 = tpu.matmul %164, %165, %cst_50 {dimension_numbers = #tpu.dot_dimension_numbers<[1], [0], [0], [1], [0, 0, 1, 1], [], []>} : vector<8x64xbf16>, vector<64x64xbf16>, vector<8x64xf32> -> vector<8x64xf32>
    %cst_51 = arith.constant 1.000000e+00 : f32
    %167 = vector.broadcast %cst_51 : f32 to vector<1x64xf32>
    %168 = arith.divf %167, %163 : vector<1x64xf32>
    %169 = vector.broadcast %168 : vector<1x64xf32> to vector<8x64xf32>
    %170 = arith.mulf %166, %169 : vector<8x64xf32>
    %171 = vector.extract_strided_slice %107 {offsets = [24, 0], sizes = [8, 64], strides = [1, 1]} : vector<96x64xf32> to vector<8x64xf32>
    %172 = vector.extract_strided_slice %107 {offsets = [56, 0], sizes = [8, 64], strides = [1, 1]} : vector<96x64xf32> to vector<8x64xf32>
    %173 = vector.extract_strided_slice %107 {offsets = [88, 0], sizes = [8, 64], strides = [1, 1]} : vector<96x64xf32> to vector<8x64xf32>
    %174 = tpu.transpose %172, [1, 0] : vector<8x64xf32> -> vector<64x8xf32>
    %175 = arith.truncf %174 : vector<64x8xf32> to vector<64x8xbf16>
    %176 = arith.truncf %171 : vector<8x64xf32> to vector<8x64xbf16>
    %cst_52 = arith.constant dense<0.000000e+00> : vector<64x64xf32>
    %177 = tpu.matmul %175, %176, %cst_52 {dimension_numbers = #tpu.dot_dimension_numbers<[1], [0], [0], [1], [0, 0, 1, 1], [], []>} : vector<64x8xbf16>, vector<8x64xbf16>, vector<64x64xf32> -> vector<64x64xf32>
    %cst_53 = arith.constant dense<0xFF800000> : vector<64xf32>
    %178 = vector.multi_reduction <maximumf>, %177, %cst_53 [0] : vector<64x64xf32> to vector<64xf32>
    %179 = vector.shape_cast %178 : vector<64xf32> to vector<1x64xf32>
    %180 = vector.broadcast %179 : vector<1x64xf32> to vector<64x64xf32>
    %181 = arith.subf %177, %180 : vector<64x64xf32>
    %182 = math.exp %181 : vector<64x64xf32>
    %cst_54 = arith.constant dense<0.000000e+00> : vector<64xf32>
    %183 = vector.multi_reduction <add>, %182, %cst_54 [0] : vector<64x64xf32> to vector<64xf32>
    %184 = vector.shape_cast %183 : vector<64xf32> to vector<1x64xf32>
    %185 = arith.truncf %173 : vector<8x64xf32> to vector<8x64xbf16>
    %186 = arith.truncf %182 : vector<64x64xf32> to vector<64x64xbf16>
    %cst_55 = arith.constant dense<0.000000e+00> : vector<8x64xf32>
    %187 = tpu.matmul %185, %186, %cst_55 {dimension_numbers = #tpu.dot_dimension_numbers<[1], [0], [0], [1], [0, 0, 1, 1], [], []>} : vector<8x64xbf16>, vector<64x64xbf16>, vector<8x64xf32> -> vector<8x64xf32>
    %cst_56 = arith.constant 1.000000e+00 : f32
    %188 = vector.broadcast %cst_56 : f32 to vector<1x64xf32>
    %189 = arith.divf %188, %184 : vector<1x64xf32>
    %190 = vector.broadcast %189 : vector<1x64xf32> to vector<8x64xf32>
    %191 = arith.mulf %187, %190 : vector<8x64xf32>
    %192 = tpu.concatenate %128, %149, %170, %191 in 0 : vector<8x64xf32>, vector<8x64xf32>, vector<8x64xf32>, vector<8x64xf32> -> vector<32x64xf32>
    %193 = arith.truncf %192 : vector<32x64xf32> to vector<32x64xbf16>
    %cst_57 = arith.constant dense<0.000000e+00> : vector<32x64xf32>
    %194 = tpu.matmul %2, %193, %cst_57 {dimension_numbers = #tpu.dot_dimension_numbers<[1], [0], [0], [1], [0, 0, 1, 1], [], []>} : vector<32x32xbf16>, vector<32x64xbf16>, vector<32x64xf32> -> vector<32x64xf32>
    %195 = vector.broadcast %3 : vector<32x1xf32> to vector<32x64xf32>
    %196 = arith.addf %194, %195 : vector<32x64xf32>
    %c1_58 = arith.constant 1 : index
    %c0_59 = arith.constant 0 : index
    %c0_60 = arith.constant 0 : index
    %197 = vector.load %arg6[%c1_58, %c0_59, %c0_60] : memref<2x32x64xf32, #tpu.memory_space<vmem>>, vector<1x32x64xf32>
    %198 = vector.shape_cast %197 : vector<1x32x64xf32> to vector<32x64xf32>
    %199 = vector.shape_cast %196 : vector<32x64xf32> to vector<1x32x64xf32>
    tpu.vector_store %arg6[%c1_58, %c0_59, %c0_60], %199 {strides = array<i32>} : memref<2x32x64xf32, #tpu.memory_space<vmem>>, vector<1x32x64xf32>,
    return
  }
  func.func @transform_0(%arg0: i32) -> (i32, i32, i32) {
    %c0_i32 = arith.constant 0 : i32
    %c0_i32_0 = arith.constant 0 : i32
    %c0_i32_1 = arith.constant 0 : i32
    return %arg0, %c0_i32, %c0_i32_0 : i32, i32, i32
  }
  func.func @transform_1(%arg0: i32) -> (i32, i32) {
    %c0_i32 = arith.constant 0 : i32
    %c0_i32_0 = arith.constant 0 : i32
    %c0_i32_1 = arith.constant 0 : i32
    return %c0_i32, %c0_i32_0 : i32, i32
  }
  func.func @transform_2(%arg0: i32) -> (i32, i32) {
    %c0_i32 = arith.constant 0 : i32
    %c0_i32_0 = arith.constant 0 : i32
    %c0_i32_1 = arith.constant 0 : i32
    return %c0_i32, %c0_i32_0 : i32, i32
  }
  func.func @transform_3(%arg0: i32) -> (i32, i32) {
    %c0_i32 = arith.constant 0 : i32
    %c0_i32_0 = arith.constant 0 : i32
    %c0_i32_1 = arith.constant 0 : i32
    return %c0_i32, %c0_i32_0 : i32, i32
  }
  func.func @transform_4(%arg0: i32) -> (i32, i32) {
    %c0_i32 = arith.constant 0 : i32
    %c0_i32_0 = arith.constant 0 : i32
    %c0_i32_1 = arith.constant 0 : i32
    return %c0_i32, %c0_i32_0 : i32, i32
  }
  func.func @transform_5(%arg0: i32) -> (i32, i32, i32) {
    %c0_i32 = arith.constant 0 : i32
    %c0_i32_0 = arith.constant 0 : i32
    %c0_i32_1 = arith.constant 0 : i32
    return %arg0, %c0_i32, %c0_i32_0 : i32, i32, i32
  }
}

</mosaic_0001>

<llo_original>
// kernel: attention_forward.1
$region0: #{attention_forward.1}
  #allocation0 [shape = 'u32[]', space=smem, size = 0x4, offset = 0x4, fixed_abs, tag = 'smem constant byte address 0x4 - core index']
  #allocation1 [shape = 'u32[144,128]{1,0:T(1,128)}', space=vmem, size = 0x12000, scoped, tag = 'internal scratch']
  %s0 = inlined_call_operand.vmem [shape: f32[2,32,64], index: 0, kind: input, shape index: {}]
  %s1 = inlined_call_operand.vmem [shape: bf16[96,32], index: 1, kind: input, shape index: {}]
  %s2 = inlined_call_operand.vmem [shape: f32[96,1], index: 2, kind: input, shape index: {}]
  %s3 = inlined_call_operand.vmem [shape: bf16[32,32], index: 3, kind: input, shape index: {}]
  %s4 = inlined_call_operand.vmem [shape: f32[32,1], index: 4, kind: input, shape index: {}]
  %s5 = inlined_call_operand.vmem [shape: f32[2,32,64], index: 5, kind: output, shape index: {}]
  %s6 = sld [smem:[#allocation0]]
  $region30: #{attention_forward.1} parent=0
    _
  %s8 = ssub.s32 1, %s6
  %s9 = scalar_select 0, %s8, %s6
  // Predicated region
  $region2: #{attention_forward.1} parent=0 // pred_check
    _
  $region3: #{attention_forward.1} parent=0 // pred_check_branch
    %11 = sbr.rel (0) target = $region5
  $region4: #{attention_forward.1} parent=0 // pred_region
    _
  $region5: #{attention_forward.1} parent=0 // pred_fallthru
    _
  // Predicated region
  $region6: #{attention_forward.1} parent=0 // pred_check
    _
  $region7: #{attention_forward.1} parent=0 // pred_check_branch
    %13 = sbr.rel (0) target = $region9
  $region8: #{attention_forward.1} parent=0 // pred_region
    _
  $region9: #{attention_forward.1} parent=0 // pred_fallthru
    _
  // Predicated region
  $region10: #{attention_forward.1} parent=0 // pred_check
    _
  $region11: #{attention_forward.1} parent=0 // pred_check_branch
    %15 = sbr.rel (0) target = $region13
  $region12: #{attention_forward.1} parent=0 // pred_region
    _
  $region13: #{attention_forward.1} parent=0 // pred_fallthru
    _
  // Predicated region
  $region14: #{attention_forward.1} parent=0 // pred_check
    _
  $region15: #{attention_forward.1} parent=0 // pred_check_branch
    %17 = sbr.rel (0) target = $region17
  $region16: #{attention_forward.1} parent=0 // pred_region
    _
  $region17: #{attention_forward.1} parent=0 // pred_fallthru
    _
  // Predicated region
  $region18: #{attention_forward.1} parent=0 // pred_check
    _
  $region19: #{attention_forward.1} parent=0 // pred_check_branch
    %19 = sbr.rel (0) target = $region21
  $region20: #{attention_forward.1} parent=0 // pred_region
    _
  $region21: #{attention_forward.1} parent=0 // pred_fallthru
    _
  %v21 = vld [vmem:[%s1] sm:$0xf]
  %v22 = vld [vmem:[%s1 + $0x4] sm:$0xf]
  %v23 = vld [vmem:[%s1 + $0x8] sm:$0xf]
  %v24 = vld [vmem:[%s1 + $0xc] sm:$0xf]
  %v25 = vld [vmem:[%s1 + $0x10] sm:$0xf]
  %v26 = vld [vmem:[%s1 + $0x14] sm:$0xf]
  %v27 = vld [vmem:[%s1 + $0x18] sm:$0xf]
  %v28 = vld [vmem:[%s1 + $0x1c] sm:$0xf]
  %v29 = vld [vmem:[%s1 + $0x20] sm:$0xf]
  %v30 = vld [vmem:[%s1 + $0x24] sm:$0xf]
  %v31 = vld [vmem:[%s1 + $0x28] sm:$0xf]
  %v32 = vld [vmem:[%s1 + $0x2c] sm:$0xf]
  %v33 = vld [vmem:[%s2] sm:$0xff]
  %v34 = vld [vmem:[%s2 + $0x8] sm:$0xff]
  %v35 = vld [vmem:[%s2 + $0x10] sm:$0xff]
  %v36 = vld [vmem:[%s2 + $0x18] sm:$0xff]
  %v37 = vld [vmem:[%s2 + $0x20] sm:$0xff]
  %v38 = vld [vmem:[%s2 + $0x28] sm:$0xff]
  %v39 = vld [vmem:[%s2 + $0x30] sm:$0xff]
  %v40 = vld [vmem:[%s2 + $0x38] sm:$0xff]
  %v41 = vld [vmem:[%s2 + $0x40] sm:$0xff]
  %v42 = vld [vmem:[%s2 + $0x48] sm:$0xff]
  %v43 = vld [vmem:[%s2 + $0x50] sm:$0xff]
  %v44 = vld [vmem:[%s2 + $0x58] sm:$0xff]
  %v45 = vld [vmem:[%s3] sm:$0xf]
  %v46 = vld [vmem:[%s3 + $0x4] sm:$0xf]
  %v47 = vld [vmem:[%s3 + $0x8] sm:$0xf]
  %v48 = vld [vmem:[%s3 + $0xc] sm:$0xf]
  %v49 = vld [vmem:[%s4] sm:$0xff]
  %v50 = vld [vmem:[%s4 + $0x8] sm:$0xff]
  %v51 = vld [vmem:[%s4 + $0x10] sm:$0xff]
  %v52 = vld [vmem:[%s4 + $0x18] sm:$0xff]
  %v53 = vld [vmem:[%s0] sm:$0xff]
  %v54 = vld [vmem:[%s0 + $0x8] sm:$0xff]
  %v55 = vld [vmem:[%s0 + $0x10] sm:$0xff]
  %v56 = vld [vmem:[%s0 + $0x18] sm:$0xff]
  %v57 = vpack.c.bf16 %v54, %v53
  %v58 = vpack.c.bf16 %v56, %v55
  %60 = vset.pattern.permute.xlu0 0
  %61 = vperm.xlu0 %60, %v33
  %v62 = vpop.permute.xlu0 %61
  %65 = vset.pattern.permute.xlu0 0
  %66 = vperm.xlu0 %65, %v34
  %v67 = vpop.permute.xlu0 %66
  %70 = vset.pattern.permute.xlu0 0
  %71 = vperm.xlu0 %70, %v35
  %v72 = vpop.permute.xlu0 %71
  %75 = vset.pattern.permute.xlu0 0
  %76 = vperm.xlu0 %75, %v36
  %v77 = vpop.permute.xlu0 %76
  %80 = vset.pattern.permute.xlu0 0
  %81 = vperm.xlu0 %80, %v37
  %v82 = vpop.permute.xlu0 %81
  %85 = vset.pattern.permute.xlu0 0
  %86 = vperm.xlu0 %85, %v38
  %v87 = vpop.permute.xlu0 %86
  %90 = vset.pattern.permute.xlu0 0
  %91 = vperm.xlu0 %90, %v39
  %v92 = vpop.permute.xlu0 %91
  %95 = vset.pattern.permute.xlu0 0
  %96 = vperm.xlu0 %95, %v40
  %v97 = vpop.permute.xlu0 %96
  %100 = vset.pattern.permute.xlu0 0
  %101 = vperm.xlu0 %100, %v41
  %v102 = vpop.permute.xlu0 %101
  %105 = vset.pattern.permute.xlu0 0
  %106 = vperm.xlu0 %105, %v42
  %v107 = vpop.permute.xlu0 %106
  %110 = vset.pattern.permute.xlu0 0
  %111 = vperm.xlu0 %110, %v43
  %v112 = vpop.permute.xlu0 %111
  %115 = vset.pattern.permute.xlu0 0
  %116 = vperm.xlu0 %115, %v44
  %v117 = vpop.permute.xlu0 %116
  %v131 = vunpack.c.l.b16 %v21
  %v132 = vunpack.c.l.b16 %v22
  %v133 = vunpack.c.l.b16 %v23
  %v134 = vunpack.c.l.b16 %v24
  %v135 = vunpack.c.l.b16 %v25
  %v136 = vunpack.c.l.b16 %v26
  %v137 = vunpack.c.l.b16 %v27
  %v138 = vunpack.c.l.b16 %v28
  %v139 = vunpack.c.l.b16 %v29
  %v140 = vunpack.c.l.b16 %v30
  %v141 = vunpack.c.l.b16 %v31
  %v142 = vunpack.c.l.b16 %v32
  %v143 = vpack.c.b16 %v132, %v131
  %v144 = vpack.c.b16 %v134, %v133
  %v145 = vpack.c.b16 %v136, %v135
  %v146 = vpack.c.b16 %v138, %v137
  %v147 = vpack.c.b16 %v140, %v139
  %v148 = vpack.c.b16 %v142, %v141
  %vm149 = vcmask 261120
  %v151 = vsel %vm149, %v143, 0
  %v154 = vsel %vm149, %v144, 0
  %v157 = vsel %vm149, %v145, 0
  %v160 = vsel %vm149, %v146, 0
  %v163 = vsel %vm149, %v147, 0
  %v166 = vsel %vm149, %v148, 0
  %168 = vmatprep.subr.bf16.mxu0 0
  %169 = vmatpush1.bf16.msra.mxu0 0
  %170 = vmatprep.subr.bf16.mxu0 0
  %171 = vmatpush1.bf16.msra.mxu0 0
  %172 = vmatprep.subr.bf16.mxu0 0
  %173 = vmatpush1.bf16.msra.mxu0 0
  %174 = vmatprep.subr.bf16.mxu0 0
  %175 = vmatpush1.bf16.msra.mxu0 0
  %176 = vmatprep.subr.bf16.mxu0 0
  %177 = vmatpush1.bf16.msra.mxu0 0
  %178 = vmatprep.subr.bf16.mxu0 0
  %179 = vmatpush1.bf16.msra.mxu0 0
  %180 = vmatprep.subr.bf16.mxu0 0
  %181 = vmatpush1.bf16.msra.mxu0 %v58
  %182 = vmatprep.subr.bf16.mxu0 0
  %183 = vmatpush1.bf16.msra.mxu0 %v57
  %184 = vmatprep.subr.bf16.mxu0 0
  %185 = vmatpush2.bf16.msra.mxu0 0
  %186 = vmatprep.subr.bf16.mxu0 0
  %187 = vmatpush2.bf16.msra.mxu0 0
  %188 = vmatprep.subr.bf16.mxu0 0
  %189 = vmatpush2.bf16.msra.mxu0 0
  %190 = vmatprep.subr.bf16.mxu0 0
  %191 = vmatpush2.bf16.msra.mxu0 0
  %192 = vmatprep.subr.bf16.mxu0 0
  %193 = vmatpush2.bf16.msra.mxu0 0
  %194 = vmatprep.subr.bf16.mxu0 0
  %195 = vmatpush2.bf16.msra.mxu0 0
  %196 = vmatprep.subr.bf16.mxu0 0
  %197 = vmatpush2.bf16.msra.mxu0 0
  %198 = vmatprep.subr.bf16.mxu0 0
  %199 = vmatpush2.bf16.msra.mxu0 0
  %200 = vmatprep.mubr.bf16.mxu0 0
  %201 = vmatmul.mubr.bf16.gmra.mxu0 %v151
  %v202 = vpop.f32.mrf.mxu0
  %v203 = vadd.f32 %v62, %v202
  %v204 = vpop.f32.mrf.mxu0
  %v205 = vpop.f32.mrf.mxu0
  %v206 = vadd.f32 %v67, %v205
  %v207 = vpop.f32.mrf.mxu0
  %208 = vmatprep.mubr.bf16.mxu0 0
  %209 = vmatmul.mubr.bf16.gmra.mxu0 %v154
  %v210 = vpop.f32.mrf.mxu0
  %v211 = vadd.f32 %v72, %v210
  %v212 = vpop.f32.mrf.mxu0
  %v213 = vpop.f32.mrf.mxu0
  %v214 = vadd.f32 %v77, %v213
  %v215 = vpop.f32.mrf.mxu0
  %216 = vmatprep.mubr.bf16.mxu0 0
  %217 = vmatmul.mubr.bf16.gmra.mxu0 %v157
  %v218 = vpop.f32.mrf.mxu0
  %v219 = vadd.f32 %v82, %v218
  %v220 = vpop.f32.mrf.mxu0
  %v221 = vpop.f32.mrf.mxu0
  %v222 = vadd.f32 %v87, %v221
  %v223 = vpop.f32.mrf.mxu0
  %224 = vmatprep.mubr.bf16.mxu0 0
  %225 = vmatmul.mubr.bf16.gmra.mxu0 %v160
  %v226 = vpop.f32.mrf.mxu0
  %v227 = vadd.f32 %v92, %v226
  %v228 = vpop.f32.mrf.mxu0
  %v229 = vpop.f32.mrf.mxu0
  %v230 = vadd.f32 %v97, %v229
  %v231 = vpop.f32.mrf.mxu0
  %232 = vmatprep.mubr.bf16.mxu0 0
  %233 = vmatmul.mubr.bf16.gmra.mxu0 %v163
  %v234 = vpop.f32.mrf.mxu0
  %v235 = vadd.f32 %v102, %v234
  %v236 = vpop.f32.mrf.mxu0
  %v237 = vpop.f32.mrf.mxu0
  %v238 = vadd.f32 %v107, %v237
  %v239 = vpop.f32.mrf.mxu0
  %240 = vmatprep.mubr.bf16.mxu0 0
  %241 = vmatmul.mubr.bf16.gmra.mxu0 %v166
  %v242 = vpop.f32.mrf.mxu0
  %v243 = vadd.f32 %v112, %v242
  %v244 = vpop.f32.mrf.mxu0
  %v245 = vpop.f32.mrf.mxu0
  %v246 = vadd.f32 %v117, %v245
  %v247 = vpop.f32.mrf.mxu0
  %248 = vdwg.mxu0
  %249 = vxpose.xlu0.b32.start [1/16] %v219, 128
  %250 = vxpose.xlu0.b32.cont [2/16] 0.0, 128
  %251 = vxpose.xlu0.b32.cont [3/16] 0.0, 128
  %252 = vxpose.xlu0.b32.cont [4/16] 0.0, 128
  %253 = vxpose.xlu0.b32.cont [5/16] 0.0, 128
  %254 = vxpose.xlu0.b32.cont [6/16] 0.0, 128
  %255 = vxpose.xlu0.b32.cont [7/16] 0.0, 128
  %256 = vxpose.xlu0.b32.cont [8/16] 0.0, 128
  %257 = vxpose.xlu0.b32.cont [9/16] 0.0, 128
  %258 = vxpose.xlu0.b32.cont [10/16] 0.0, 128
  %259 = vxpose.xlu0.b32.cont [11/16] 0.0, 128
  %260 = vxpose.xlu0.b32.cont [12/16] 0.0, 128
  %261 = vxpose.xlu0.b32.cont [13/16] 0.0, 128
  %262 = vxpose.xlu0.b32.cont [14/16] 0.0, 128
  %263 = vxpose.xlu0.b32.cont [15/16] 0.0, 128
  %264 = vxpose.xlu0.b32.end [16/16] 0.0, 128
  %v265 = vpop.trf.xlu0
  %v266 = vpop.trf.xlu0
  %v267 = vpop.trf.xlu0
  %v268 = vpop.trf.xlu0
  %v269 = vpop.trf.xlu0
  %v270 = vpop.trf.xlu0
  %v271 = vpop.trf.xlu0
  %v272 = vpop.trf.xlu0
  %v273 = vpop.trf.xlu0
  %v274 = vpop.trf.xlu0
  %v275 = vpop.trf.xlu0
  %v276 = vpop.trf.xlu0
  %v277 = vpop.trf.xlu0
  %v278 = vpop.trf.xlu0
  %v279 = vpop.trf.xlu0
  %v280 = vpop.trf.xlu0
  %v281 = vpack.c.bf16 %v266, %v265
  %v282 = vpack.c.bf16 %v268, %v267
  %v283 = vpack.c.bf16 %v270, %v269
  %v284 = vpack.c.bf16 %v272, %v271
  %v285 = vpack.c.bf16 %v203, %v203
  %vm286 = vcmask 64512
  %v288 = vsel %vm286, %v281, 0
  %v291 = vsel %vm286, %v282, 0
  %v294 = vsel %vm286, %v283, 0
  %v297 = vsel %vm286, %v284, 0
  %vm299 = vcmask 1043456
  %v301 = vsel %vm299, %v285, 0
  %303 = vmatprep.subr.bf16.mxu0 0
  %304 = vmatpush1.bf16.msra.mxu0 0
  %305 = vmatprep.subr.bf16.mxu0 0
  %306 = vmatpush1.bf16.msra.mxu0 0
  %307 = vmatprep.subr.bf16.mxu0 0
  %308 = vmatpush1.bf16.msra.mxu0 0
  %309 = vmatprep.subr.bf16.mxu0 0
  %310 = vmatpush1.bf16.msra.mxu0 0
  %311 = vmatprep.subr.bf16.mxu0 0
  %312 = vmatpush1.bf16.msra.mxu0 0
  %313 = vmatprep.subr.bf16.mxu0 0
  %314 = vmatpush1.bf16.msra.mxu0 0
  %315 = vmatprep.subr.bf16.mxu0 0
  %316 = vmatpush1.bf16.msra.mxu0 0
  %317 = vmatprep.subr.bf16.mxu0 0
  %318 = vmatpush1.bf16.msra.mxu0 %v301
  %319 = vmatprep.subr.bf16.mxu0 0
  %320 = vmatpush2.bf16.msra.mxu0 0
  %321 = vmatprep.subr.bf16.mxu0 0
  %322 = vmatpush2.bf16.msra.mxu0 0
  %323 = vmatprep.subr.bf16.mxu0 0
  %324 = vmatpush2.bf16.msra.mxu0 0
  %325 = vmatprep.subr.bf16.mxu0 0
  %326 = vmatpush2.bf16.msra.mxu0 0
  %327 = vmatprep.subr.bf16.mxu0 0
  %328 = vmatpush2.bf16.msra.mxu0 0
  %329 = vmatprep.subr.bf16.mxu0 0
  %330 = vmatpush2.bf16.msra.mxu0 0
  %331 = vmatprep.subr.bf16.mxu0 0
  %332 = vmatpush2.bf16.msra.mxu0 0
  %333 = vmatprep.subr.bf16.mxu0 0
  %334 = vmatpush2.bf16.msra.mxu0 0
  %335 = vmatprep.mubr.bf16.mxu0 0
  %336 = vmatmul.mubr.bf16.gmra.mxu0 %v288
  %v337 = vpop.f32.mrf.mxu0
  %v338 = vadd.f32 0.0, %v337
  %v339 = vpop.f32.mrf.mxu0
  %v340 = vpop.f32.mrf.mxu0
  %v341 = vadd.f32 0.0, %v340
  %v342 = vpop.f32.mrf.mxu0
  %343 = vmatprep.mubr.bf16.mxu0 0
  %344 = vmatmul.mubr.bf16.gmra.mxu0 %v291
  %v345 = vpop.f32.mrf.mxu0
  %v346 = vadd.f32 0.0, %v345
  %v347 = vpop.f32.mrf.mxu0
  %v348 = vpop.f32.mrf.mxu0
  %v349 = vadd.f32 0.0, %v348
  %v350 = vpop.f32.mrf.mxu0
  %351 = vmatprep.mubr.bf16.mxu0 0
  %352 = vmatmul.mubr.bf16.gmra.mxu0 %v294
  %v353 = vpop.f32.mrf.mxu0
  %v354 = vadd.f32 0.0, %v353
  %v355 = vpop.f32.mrf.mxu0
  %v356 = vpop.f32.mrf.mxu0
  %v357 = vadd.f32 0.0, %v356
  %v358 = vpop.f32.mrf.mxu0
  %359 = vmatprep.mubr.bf16.mxu0 0
  %360 = vmatmul.mubr.bf16.gmra.mxu0 %v297
  %v361 = vpop.f32.mrf.mxu0
  %v362 = vadd.f32 0.0, %v361
  %v363 = vpop.f32.mrf.mxu0
  %v364 = vpop.f32.mrf.mxu0
  %v365 = vadd.f32 0.0, %v364
  %v366 = vpop.f32.mrf.mxu0
  %367 = vdwg.mxu0
  %vm368 = vcmask 523264
  %v369 = vsel %vm368, %v338, -inf
  %v370 = vsel %vm368, %v341, -inf
  %v371 = vsel %vm368, %v346, -inf
  %v372 = vsel %vm368, %v349, -inf
  %v373 = vsel %vm368, %v354, -inf
  %v374 = vmax.f32 %v369, %v373
  %v375 = vsel %vm368, %v357, -inf
  %v376 = vmax.f32 %v370, %v375
  %v377 = vsel %vm368, %v362, -inf
  %v378 = vmax.f32 %v371, %v377
  %v379 = vsel %vm368, %v365, -inf
  %v380 = vmax.f32 %v372, %v379
  %v381 = vmax.f32 %v374, %v376
  %v382 = vmax.f32 %v378, %v380
  %v383 = vmax.f32 %v381, %v382
  %v384 = vrot.slane %v383, 4
  %v385 = vmax.f32 %v383, %v384
  %v386 = vrot.slane %v385, 2
  %v387 = vmax.f32 %v385, %v386
  %v388 = vrot.slane %v387, 1
  %v389 = vmax.f32 %v387, %v388
  %v390 = vsub.f32 %v338, %v389
  %v391 = vsub.f32 %v341, %v389
  %v392 = vsub.f32 %v346, %v389
  %v393 = vsub.f32 %v349, %v389
  %v394 = vsub.f32 %v354, %v389
  %v395 = vsub.f32 %v357, %v389
  %v396 = vsub.f32 %v362, %v389
  %v397 = vsub.f32 %v365, %v389
  %v398 = vmul.f32 %v390, 1.442695
  %v399 = vpow.pop %v398
  %v400 = vmul.f32 %v391, 1.442695
  %v401 = vpow.pop %v400
  %v402 = vmul.f32 %v392, 1.442695
  %v403 = vpow.pop %v402
  %v404 = vmul.f32 %v393, 1.442695
  %v405 = vpow.pop %v404
  %v406 = vmul.f32 %v394, 1.442695
  %v407 = vpow.pop %v406
  %v408 = vmul.f32 %v395, 1.442695
  %v409 = vpow.pop %v408
  %v410 = vmul.f32 %v396, 1.442695
  %v411 = vpow.pop %v410
  %v412 = vmul.f32 %v397, 1.442695
  %v413 = vpow.pop %v412
  %v414 = vsel %vm368, %v399, 0.0
  %v415 = vsel %vm368, %v401, 0.0
  %v416 = vadd.f32 %v414, %v415
  %v417 = vsel %vm368, %v403, 0.0
  %v418 = vadd.f32 %v416, %v417
  %v419 = vsel %vm368, %v405, 0.0
  %v420 = vadd.f32 %v418, %v419
  %v421 = vsel %vm368, %v407, 0.0
  %v422 = vadd.f32 %v420, %v421
  %v423 = vsel %vm368, %v409, 0.0
  %v424 = vadd.f32 %v422, %v423
  %v425 = vsel %vm368, %v411, 0.0
  %v426 = vadd.f32 %v424, %v425
  %v427 = vsel %vm368, %v413, 0.0
  %v428 = vadd.f32 %v426, %v427
  %v429 = vrot.slane %v428, 4
  %v430 = vadd.f32 %v428, %v429
  %v431 = vrot.slane %v430, 2
  %v432 = vadd.f32 %v430, %v431
  %v433 = vrot.slane %v432, 1
  %v434 = vadd.f32 %v432, %v433
  %v435 = vpack.c.bf16 %v235, %v235
  %v436 = vpack.c.bf16 %v401, %v399
  %v437 = vpack.c.bf16 %v405, %v403
  %v438 = vpack.c.bf16 %v409, %v407
  %v439 = vpack.c.bf16 %v413, %v411
  %v441 = vsel %vm368, %v435, 0
  %443 = vmatprep.subr.bf16.mxu0 0
  %444 = vmatpush1.bf16.msra.mxu0 0
  %445 = vmatprep.subr.bf16.mxu0 0
  %446 = vmatpush1.bf16.msra.mxu0 0
  %447 = vmatprep.subr.bf16.mxu0 0
  %448 = vmatpush1.bf16.msra.mxu0 0
  %449 = vmatprep.subr.bf16.mxu0 0
  %450 = vmatpush1.bf16.msra.mxu0 0
  %451 = vmatprep.subr.bf16.mxu0 0
  %452 = vmatpush1.bf16.msra.mxu0 %v439
  %453 = vmatprep.subr.bf16.mxu0 0
  %454 = vmatpush1.bf16.msra.mxu0 %v438
  %455 = vmatprep.subr.bf16.mxu0 0
  %456 = vmatpush1.bf16.msra.mxu0 %v437
  %457 = vmatprep.subr.bf16.mxu0 0
  %458 = vmatpush1.bf16.msra.mxu0 %v436
  %459 = vmatprep.subr.bf16.mxu0 0
  %460 = vmatpush2.bf16.msra.mxu0 0
  %461 = vmatprep.subr.bf16.mxu0 0
  %462 = vmatpush2.bf16.msra.mxu0 0
  %463 = vmatprep.subr.bf16.mxu0 0
  %464 = vmatpush2.bf16.msra.mxu0 0
  %465 = vmatprep.subr.bf16.mxu0 0
  %466 = vmatpush2.bf16.msra.mxu0 0
  %467 = vmatprep.subr.bf16.mxu0 0
  %468 = vmatpush2.bf16.msra.mxu0 0
  %469 = vmatprep.subr.bf16.mxu0 0
  %470 = vmatpush2.bf16.msra.mxu0 0
  %471 = vmatprep.subr.bf16.mxu0 0
  %472 = vmatpush2.bf16.msra.mxu0 0
  %473 = vmatprep.subr.bf16.mxu0 0
  %474 = vmatpush2.bf16.msra.mxu0 0
  %475 = vmatprep.mubr.bf16.mxu0 0
  %476 = vmatmul.mubr.bf16.gmra.mxu0 %v441
  %v477 = vpop.f32.mrf.mxu0
  %v478 = vadd.f32 0.0, %v477
  %v479 = vpop.f32.mrf.mxu0
  %v480 = vpop.f32.mrf.mxu0
  %v481 = vpop.f32.mrf.mxu0
  %482 = vdwg.mxu0
  %v483 = vrcp.pop %v434
  %v484 = vmul.f32 1.0, %v483
  %v485 = vmul.f32 %v478, %v484
  %486 = vxpose.xlu0.b32.start [1/16] %v222, 128
  %487 = vxpose.xlu0.b32.cont [2/16] 0.0, 128
  %488 = vxpose.xlu0.b32.cont [3/16] 0.0, 128
  %489 = vxpose.xlu0.b32.cont [4/16] 0.0, 128
  %490 = vxpose.xlu0.b32.cont [5/16] 0.0, 128
  %491 = vxpose.xlu0.b32.cont [6/16] 0.0, 128
  %492 = vxpose.xlu0.b32.cont [7/16] 0.0, 128
  %493 = vxpose.xlu0.b32.cont [8/16] 0.0, 128
  %494 = vxpose.xlu0.b32.cont [9/16] 0.0, 128
  %495 = vxpose.xlu0.b32.cont [10/16] 0.0, 128
  %496 = vxpose.xlu0.b32.cont [11/16] 0.0, 128
  %497 = vxpose.xlu0.b32.cont [12/16] 0.0, 128
  %498 = vxpose.xlu0.b32.cont [13/16] 0.0, 128
  %499 = vxpose.xlu0.b32.cont [14/16] 0.0, 128
  %500 = vxpose.xlu0.b32.cont [15/16] 0.0, 128
  %501 = vxpose.xlu0.b32.end [16/16] 0.0, 128
  %v502 = vpop.trf.xlu0
  %v503 = vpop.trf.xlu0
  %v504 = vpop.trf.xlu0
  %v505 = vpop.trf.xlu0
  %v506 = vpop.trf.xlu0
  %v507 = vpop.trf.xlu0
  %v508 = vpop.trf.xlu0
  %v509 = vpop.trf.xlu0
  %v510 = vpop.trf.xlu0
  %v511 = vpop.trf.xlu0
  %v512 = vpop.trf.xlu0
  %v513 = vpop.trf.xlu0
  %v514 = vpop.trf.xlu0
  %v515 = vpop.trf.xlu0
  %v516 = vpop.trf.xlu0
  %v517 = vpop.trf.xlu0
  %v518 = vpack.c.bf16 %v503, %v502
  %v519 = vpack.c.bf16 %v505, %v504
  %v520 = vpack.c.bf16 %v507, %v506
  %v521 = vpack.c.bf16 %v509, %v508
  %v522 = vpack.c.bf16 %v206, %v206
  %v524 = vsel %vm286, %v518, 0
  %v527 = vsel %vm286, %v519, 0
  %v530 = vsel %vm286, %v520, 0
  %v533 = vsel %vm286, %v521, 0
  %v536 = vsel %vm299, %v522, 0
  %538 = vmatprep.subr.bf16.mxu0 0
  %539 = vmatpush1.bf16.msra.mxu0 0
  %540 = vmatprep.subr.bf16.mxu0 0
  %541 = vmatpush1.bf16.msra.mxu0 0
  %542 = vmatprep.subr.bf16.mxu0 0
  %543 = vmatpush1.bf16.msra.mxu0 0
  %544 = vmatprep.subr.bf16.mxu0 0
  %545 = vmatpush1.bf16.msra.mxu0 0
  %546 = vmatprep.subr.bf16.mxu0 0
  %547 = vmatpush1.bf16.msra.mxu0 0
  %548 = vmatprep.subr.bf16.mxu0 0
  %549 = vmatpush1.bf16.msra.mxu0 0
  %550 = vmatprep.subr.bf16.mxu0 0
  %551 = vmatpush1.bf16.msra.mxu0 0
  %552 = vmatprep.subr.bf16.mxu0 0
  %553 = vmatpush1.bf16.msra.mxu0 %v536
  %554 = vmatprep.subr.bf16.mxu0 0
  %555 = vmatpush2.bf16.msra.mxu0 0
  %556 = vmatprep.subr.bf16.mxu0 0
  %557 = vmatpush2.bf16.msra.mxu0 0
  %558 = vmatprep.subr.bf16.mxu0 0
  %559 = vmatpush2.bf16.msra.mxu0 0
  %560 = vmatprep.subr.bf16.mxu0 0
  %561 = vmatpush2.bf16.msra.mxu0 0
  %562 = vmatprep.subr.bf16.mxu0 0
  %563 = vmatpush2.bf16.msra.mxu0 0
  %564 = vmatprep.subr.bf16.mxu0 0
  %565 = vmatpush2.bf16.msra.mxu0 0
  %566 = vmatprep.subr.bf16.mxu0 0
  %567 = vmatpush2.bf16.msra.mxu0 0
  %568 = vmatprep.subr.bf16.mxu0 0
  %569 = vmatpush2.bf16.msra.mxu0 0
  %570 = vmatprep.mubr.bf16.mxu0 0
  %571 = vmatmul.mubr.bf16.gmra.mxu0 %v524
  %v572 = vpop.f32.mrf.mxu0
  %v573 = vadd.f32 0.0, %v572
  %v574 = vpop.f32.mrf.mxu0
  %v575 = vpop.f32.mrf.mxu0
  %v576 = vadd.f32 0.0, %v575
  %v577 = vpop.f32.mrf.mxu0
  %578 = vmatprep.mubr.bf16.mxu0 0
  %579 = vmatmul.mubr.bf16.gmra.mxu0 %v527
  %v580 = vpop.f32.mrf.mxu0
  %v581 = vadd.f32 0.0, %v580
  %v582 = vpop.f32.mrf.mxu0
  %v583 = vpop.f32.mrf.mxu0
  %v584 = vadd.f32 0.0, %v583
  %v585 = vpop.f32.mrf.mxu0
  %586 = vmatprep.mubr.bf16.mxu0 0
  %587 = vmatmul.mubr.bf16.gmra.mxu0 %v530
  %v588 = vpop.f32.mrf.mxu0
  %v589 = vadd.f32 0.0, %v588
  %v590 = vpop.f32.mrf.mxu0
  %v591 = vpop.f32.mrf.mxu0
  %v592 = vadd.f32 0.0, %v591
  %v593 = vpop.f32.mrf.mxu0
  %594 = vmatprep.mubr.bf16.mxu0 0
  %595 = vmatmul.mubr.bf16.gmra.mxu0 %v533
  %v596 = vpop.f32.mrf.mxu0
  %v597 = vadd.f32 0.0, %v596
  %v598 = vpop.f32.mrf.mxu0
  %v599 = vpop.f32.mrf.mxu0
  %v600 = vadd.f32 0.0, %v599
  %v601 = vpop.f32.mrf.mxu0
  %602 = vdwg.mxu0
  %v603 = vsel %vm368, %v573, -inf
  %v604 = vsel %vm368, %v576, -inf
  %v605 = vsel %vm368, %v581, -inf
  %v606 = vsel %vm368, %v584, -inf
  %v607 = vsel %vm368, %v589, -inf
  %v608 = vmax.f32 %v603, %v607
  %v609 = vsel %vm368, %v592, -inf
  %v610 = vmax.f32 %v604, %v609
  %v611 = vsel %vm368, %v597, -inf
  %v612 = vmax.f32 %v605, %v611
  %v613 = vsel %vm368, %v600, -inf
  %v614 = vmax.f32 %v606, %v613
  %v615 = vmax.f32 %v608, %v610
  %v616 = vmax.f32 %v612, %v614
  %v617 = vmax.f32 %v615, %v616
  %v618 = vrot.slane %v617, 4
  %v619 = vmax.f32 %v617, %v618
  %v620 = vrot.slane %v619, 2
  %v621 = vmax.f32 %v619, %v620
  %v622 = vrot.slane %v621, 1
  %v623 = vmax.f32 %v621, %v622
  %v624 = vsub.f32 %v573, %v623
  %v625 = vsub.f32 %v576, %v623
  %v626 = vsub.f32 %v581, %v623
  %v627 = vsub.f32 %v584, %v623
  %v628 = vsub.f32 %v589, %v623
  %v629 = vsub.f32 %v592, %v623
  %v630 = vsub.f32 %v597, %v623
  %v631 = vsub.f32 %v600, %v623
  %v632 = vmul.f32 %v624, 1.442695
  %v633 = vpow.pop %v632
  %v634 = vmul.f32 %v625, 1.442695
  %v635 = vpow.pop %v634
  %v636 = vmul.f32 %v626, 1.442695
  %v637 = vpow.pop %v636
  %v638 = vmul.f32 %v627, 1.442695
  %v639 = vpow.pop %v638
  %v640 = vmul.f32 %v628, 1.442695
  %v641 = vpow.pop %v640
  %v642 = vmul.f32 %v629, 1.442695
  %v643 = vpow.pop %v642
  %v644 = vmul.f32 %v630, 1.442695
  %v645 = vpow.pop %v644
  %v646 = vmul.f32 %v631, 1.442695
  %v647 = vpow.pop %v646
  %v648 = vsel %vm368, %v633, 0.0
  %v649 = vsel %vm368, %v635, 0.0
  %v650 = vadd.f32 %v648, %v649
  %v651 = vsel %vm368, %v637, 0.0
  %v652 = vadd.f32 %v650, %v651
  %v653 = vsel %vm368, %v639, 0.0
  %v654 = vadd.f32 %v652, %v653
  %v655 = vsel %vm368, %v641, 0.0
  %v656 = vadd.f32 %v654, %v655
  %v657 = vsel %vm368, %v643, 0.0
  %v658 = vadd.f32 %v656, %v657
  %v659 = vsel %vm368, %v645, 0.0
  %v660 = vadd.f32 %v658, %v659
  %v661 = vsel %vm368, %v647, 0.0
  %v662 = vadd.f32 %v660, %v661
  %v663 = vrot.slane %v662, 4
  %v664 = vadd.f32 %v662, %v663
  %v665 = vrot.slane %v664, 2
  %v666 = vadd.f32 %v664, %v665
  %v667 = vrot.slane %v666, 1
  %v668 = vadd.f32 %v666, %v667
  %v669 = vpack.c.bf16 %v238, %v238
  %v670 = vpack.c.bf16 %v635, %v633
  %v671 = vpack.c.bf16 %v639, %v637
  %v672 = vpack.c.bf16 %v643, %v641
  %v673 = vpack.c.bf16 %v647, %v645
  %v675 = vsel %vm368, %v669, 0
  %677 = vmatprep.subr.bf16.mxu0 0
  %678 = vmatpush1.bf16.msra.mxu0 0
  %679 = vmatprep.subr.bf16.mxu0 0
  %680 = vmatpush1.bf16.msra.mxu0 0
  %681 = vmatprep.subr.bf16.mxu0 0
  %682 = vmatpush1.bf16.msra.mxu0 0
  %683 = vmatprep.subr.bf16.mxu0 0
  %684 = vmatpush1.bf16.msra.mxu0 0
  %685 = vmatprep.subr.bf16.mxu0 0
  %686 = vmatpush1.bf16.msra.mxu0 %v673
  %687 = vmatprep.subr.bf16.mxu0 0
  %688 = vmatpush1.bf16.msra.mxu0 %v672
  %689 = vmatprep.subr.bf16.mxu0 0
  %690 = vmatpush1.bf16.msra.mxu0 %v671
  %691 = vmatprep.subr.bf16.mxu0 0
  %692 = vmatpush1.bf16.msra.mxu0 %v670
  %693 = vmatprep.subr.bf16.mxu0 0
  %694 = vmatpush2.bf16.msra.mxu0 0
  %695 = vmatprep.subr.bf16.mxu0 0
  %696 = vmatpush2.bf16.msra.mxu0 0
  %697 = vmatprep.subr.bf16.mxu0 0
  %698 = vmatpush2.bf16.msra.mxu0 0
  %699 = vmatprep.subr.bf16.mxu0 0
  %700 = vmatpush2.bf16.msra.mxu0 0
  %701 = vmatprep.subr.bf16.mxu0 0
  %702 = vmatpush2.bf16.msra.mxu0 0
  %703 = vmatprep.subr.bf16.mxu0 0
  %704 = vmatpush2.bf16.msra.mxu0 0
  %705 = vmatprep.subr.bf16.mxu0 0
  %706 = vmatpush2.bf16.msra.mxu0 0
  %707 = vmatprep.subr.bf16.mxu0 0
  %708 = vmatpush2.bf16.msra.mxu0 0
  %709 = vmatprep.mubr.bf16.mxu0 0
  %710 = vmatmul.mubr.bf16.gmra.mxu0 %v675
  %v711 = vpop.f32.mrf.mxu0
  %v712 = vadd.f32 0.0, %v711
  %v713 = vpop.f32.mrf.mxu0
  %v714 = vpop.f32.mrf.mxu0
  %v715 = vpop.f32.mrf.mxu0
  %716 = vdwg.mxu0
  %v717 = vrcp.pop %v668
  %v718 = vmul.f32 1.0, %v717
  %v719 = vmul.f32 %v712, %v718
  %720 = vxpose.xlu0.b32.start [1/16] %v227, 128
  %721 = vxpose.xlu0.b32.cont [2/16] 0.0, 128
  %722 = vxpose.xlu0.b32.cont [3/16] 0.0, 128
  %723 = vxpose.xlu0.b32.cont [4/16] 0.0, 128
  %724 = vxpose.xlu0.b32.cont [5/16] 0.0, 128
  %725 = vxpose.xlu0.b32.cont [6/16] 0.0, 128
  %726 = vxpose.xlu0.b32.cont [7/16] 0.0, 128
  %727 = vxpose.xlu0.b32.cont [8/16] 0.0, 128
  %728 = vxpose.xlu0.b32.cont [9/16] 0.0, 128
  %729 = vxpose.xlu0.b32.cont [10/16] 0.0, 128
  %730 = vxpose.xlu0.b32.cont [11/16] 0.0, 128
  %731 = vxpose.xlu0.b32.cont [12/16] 0.0, 128
  %732 = vxpose.xlu0.b32.cont [13/16] 0.0, 128
  %733 = vxpose.xlu0.b32.cont [14/16] 0.0, 128
  %734 = vxpose.xlu0.b32.cont [15/16] 0.0, 128
  %735 = vxpose.xlu0.b32.end [16/16] 0.0, 128
  %v736 = vpop.trf.xlu0
  %v737 = vpop.trf.xlu0
  %v738 = vpop.trf.xlu0
  %v739 = vpop.trf.xlu0
  %v740 = vpop.trf.xlu0
  %v741 = vpop.trf.xlu0
  %v742 = vpop.trf.xlu0
  %v743 = vpop.trf.xlu0
  %v744 = vpop.trf.xlu0
  %v745 = vpop.trf.xlu0
  %v746 = vpop.trf.xlu0
  %v747 = vpop.trf.xlu0
  %v748 = vpop.trf.xlu0
  %v749 = vpop.trf.xlu0
  %v750 = vpop.trf.xlu0
  %v751 = vpop.trf.xlu0
  %v752 = vpack.c.bf16 %v737, %v736
  %v753 = vpack.c.bf16 %v739, %v738
  %v754 = vpack.c.bf16 %v741, %v740
  %v755 = vpack.c.bf16 %v743, %v742
  %v756 = vpack.c.bf16 %v211, %v211
  %v758 = vsel %vm286, %v752, 0
  %v761 = vsel %vm286, %v753, 0
  %v764 = vsel %vm286, %v754, 0
  %v767 = vsel %vm286, %v755, 0
  %v770 = vsel %vm299, %v756, 0
  %772 = vmatprep.subr.bf16.mxu0 0
  %773 = vmatpush1.bf16.msra.mxu0 0
  %774 = vmatprep.subr.bf16.mxu0 0
  %775 = vmatpush1.bf16.msra.mxu0 0
  %776 = vmatprep.subr.bf16.mxu0 0
  %777 = vmatpush1.bf16.msra.mxu0 0
  %778 = vmatprep.subr.bf16.mxu0 0
  %779 = vmatpush1.bf16.msra.mxu0 0
  %780 = vmatprep.subr.bf16.mxu0 0
  %781 = vmatpush1.bf16.msra.mxu0 0
  %782 = vmatprep.subr.bf16.mxu0 0
  %783 = vmatpush1.bf16.msra.mxu0 0
  %784 = vmatprep.subr.bf16.mxu0 0
  %785 = vmatpush1.bf16.msra.mxu0 0
  %786 = vmatprep.subr.bf16.mxu0 0
  %787 = vmatpush1.bf16.msra.mxu0 %v770
  %788 = vmatprep.subr.bf16.mxu0 0
  %789 = vmatpush2.bf16.msra.mxu0 0
  %790 = vmatprep.subr.bf16.mxu0 0
  %791 = vmatpush2.bf16.msra.mxu0 0
  %792 = vmatprep.subr.bf16.mxu0 0
  %793 = vmatpush2.bf16.msra.mxu0 0
  %794 = vmatprep.subr.bf16.mxu0 0
  %795 = vmatpush2.bf16.msra.mxu0 0
  %796 = vmatprep.subr.bf16.mxu0 0
  %797 = vmatpush2.bf16.msra.mxu0 0
  %798 = vmatprep.subr.bf16.mxu0 0
  %799 = vmatpush2.bf16.msra.mxu0 0
  %800 = vmatprep.subr.bf16.mxu0 0
  %801 = vmatpush2.bf16.msra.mxu0 0
  %802 = vmatprep.subr.bf16.mxu0 0
  %803 = vmatpush2.bf16.msra.mxu0 0
  %804 = vmatprep.mubr.bf16.mxu0 0
  %805 = vmatmul.mubr.bf16.gmra.mxu0 %v758
  %v806 = vpop.f32.mrf.mxu0
  %v807 = vadd.f32 0.0, %v806
  %v808 = vpop.f32.mrf.mxu0
  %v809 = vpop.f32.mrf.mxu0
  %v810 = vadd.f32 0.0, %v809
  %v811 = vpop.f32.mrf.mxu0
  %812 = vmatprep.mubr.bf16.mxu0 0
  %813 = vmatmul.mubr.bf16.gmra.mxu0 %v761
  %v814 = vpop.f32.mrf.mxu0
  %v815 = vadd.f32 0.0, %v814
  %v816 = vpop.f32.mrf.mxu0
  %v817 = vpop.f32.mrf.mxu0
  %v818 = vadd.f32 0.0, %v817
  %v819 = vpop.f32.mrf.mxu0
  %820 = vmatprep.mubr.bf16.mxu0 0
  %821 = vmatmul.mubr.bf16.gmra.mxu0 %v764
  %v822 = vpop.f32.mrf.mxu0
  %v823 = vadd.f32 0.0, %v822
  %v824 = vpop.f32.mrf.mxu0
  %v825 = vpop.f32.mrf.mxu0
  %v826 = vadd.f32 0.0, %v825
  %v827 = vpop.f32.mrf.mxu0
  %828 = vmatprep.mubr.bf16.mxu0 0
  %829 = vmatmul.mubr.bf16.gmra.mxu0 %v767
  %v830 = vpop.f32.mrf.mxu0
  %v831 = vadd.f32 0.0, %v830
  %v832 = vpop.f32.mrf.mxu0
  %v833 = vpop.f32.mrf.mxu0
  %v834 = vadd.f32 0.0, %v833
  %v835 = vpop.f32.mrf.mxu0
  %836 = vdwg.mxu0
  %v837 = vsel %vm368, %v807, -inf
  %v838 = vsel %vm368, %v810, -inf
  %v839 = vsel %vm368, %v815, -inf
  %v840 = vsel %vm368, %v818, -inf
  %v841 = vsel %vm368, %v823, -inf
  %v842 = vmax.f32 %v837, %v841
  %v843 = vsel %vm368, %v826, -inf
  %v844 = vmax.f32 %v838, %v843
  %v845 = vsel %vm368, %v831, -inf
  %v846 = vmax.f32 %v839, %v845
  %v847 = vsel %vm368, %v834, -inf
  %v848 = vmax.f32 %v840, %v847
  %v849 = vmax.f32 %v842, %v844
  %v850 = vmax.f32 %v846, %v848
  %v851 = vmax.f32 %v849, %v850
  %v852 = vrot.slane %v851, 4
  %v853 = vmax.f32 %v851, %v852
  %v854 = vrot.slane %v853, 2
  %v855 = vmax.f32 %v853, %v854
  %v856 = vrot.slane %v855, 1
  %v857 = vmax.f32 %v855, %v856
  %v858 = vsub.f32 %v807, %v857
  %v859 = vsub.f32 %v810, %v857
  %v860 = vsub.f32 %v815, %v857
  %v861 = vsub.f32 %v818, %v857
  %v862 = vsub.f32 %v823, %v857
  %v863 = vsub.f32 %v826, %v857
  %v864 = vsub.f32 %v831, %v857
  %v865 = vsub.f32 %v834, %v857
  %v866 = vmul.f32 %v858, 1.442695
  %v867 = vpow.pop %v866
  %v868 = vmul.f32 %v859, 1.442695
  %v869 = vpow.pop %v868
  %v870 = vmul.f32 %v860, 1.442695
  %v871 = vpow.pop %v870
  %v872 = vmul.f32 %v861, 1.442695
  %v873 = vpow.pop %v872
  %v874 = vmul.f32 %v862, 1.442695
  %v875 = vpow.pop %v874
  %v876 = vmul.f32 %v863, 1.442695
  %v877 = vpow.pop %v876
  %v878 = vmul.f32 %v864, 1.442695
  %v879 = vpow.pop %v878
  %v880 = vmul.f32 %v865, 1.442695
  %v881 = vpow.pop %v880
  %v882 = vsel %vm368, %v867, 0.0
  %v883 = vsel %vm368, %v869, 0.0
  %v884 = vadd.f32 %v882, %v883
  %v885 = vsel %vm368, %v871, 0.0
  %v886 = vadd.f32 %v884, %v885
  %v887 = vsel %vm368, %v873, 0.0
  %v888 = vadd.f32 %v886, %v887
  %v889 = vsel %vm368, %v875, 0.0
  %v890 = vadd.f32 %v888, %v889
  %v891 = vsel %vm368, %v877, 0.0
  %v892 = vadd.f32 %v890, %v891
  %v893 = vsel %vm368, %v879, 0.0
  %v894 = vadd.f32 %v892, %v893
  %v895 = vsel %vm368, %v881, 0.0
  %v896 = vadd.f32 %v894, %v895
  %v897 = vrot.slane %v896, 4
  %v898 = vadd.f32 %v896, %v897
  %v899 = vrot.slane %v898, 2
  %v900 = vadd.f32 %v898, %v899
  %v901 = vrot.slane %v900, 1
  %v902 = vadd.f32 %v900, %v901
  %v903 = vpack.c.bf16 %v243, %v243
  %v904 = vpack.c.bf16 %v869, %v867
  %v905 = vpack.c.bf16 %v873, %v871
  %v906 = vpack.c.bf16 %v877, %v875
  %v907 = vpack.c.bf16 %v881, %v879
  %v909 = vsel %vm368, %v903, 0
  %911 = vmatprep.subr.bf16.mxu0 0
  %912 = vmatpush1.bf16.msra.mxu0 0
  %913 = vmatprep.subr.bf16.mxu0 0
  %914 = vmatpush1.bf16.msra.mxu0 0
  %915 = vmatprep.subr.bf16.mxu0 0
  %916 = vmatpush1.bf16.msra.mxu0 0
  %917 = vmatprep.subr.bf16.mxu0 0
  %918 = vmatpush1.bf16.msra.mxu0 0
  %919 = vmatprep.subr.bf16.mxu0 0
  %920 = vmatpush1.bf16.msra.mxu0 %v907
  %921 = vmatprep.subr.bf16.mxu0 0
  %922 = vmatpush1.bf16.msra.mxu0 %v906
  %923 = vmatprep.subr.bf16.mxu0 0
  %924 = vmatpush1.bf16.msra.mxu0 %v905
  %925 = vmatprep.subr.bf16.mxu0 0
  %926 = vmatpush1.bf16.msra.mxu0 %v904
  %927 = vmatprep.subr.bf16.mxu0 0
  %928 = vmatpush2.bf16.msra.mxu0 0
  %929 = vmatprep.subr.bf16.mxu0 0
  %930 = vmatpush2.bf16.msra.mxu0 0
  %931 = vmatprep.subr.bf16.mxu0 0
  %932 = vmatpush2.bf16.msra.mxu0 0
  %933 = vmatprep.subr.bf16.mxu0 0
  %934 = vmatpush2.bf16.msra.mxu0 0
  %935 = vmatprep.subr.bf16.mxu0 0
  %936 = vmatpush2.bf16.msra.mxu0 0
  %937 = vmatprep.subr.bf16.mxu0 0
  %938 = vmatpush2.bf16.msra.mxu0 0
  %939 = vmatprep.subr.bf16.mxu0 0
  %940 = vmatpush2.bf16.msra.mxu0 0
  %941 = vmatprep.subr.bf16.mxu0 0
  %942 = vmatpush2.bf16.msra.mxu0 0
  %943 = vmatprep.mubr.bf16.mxu0 0
  %944 = vmatmul.mubr.bf16.gmra.mxu0 %v909
  %v945 = vpop.f32.mrf.mxu0
  %v946 = vadd.f32 0.0, %v945
  %v947 = vpop.f32.mrf.mxu0
  %v948 = vpop.f32.mrf.mxu0
  %v949 = vpop.f32.mrf.mxu0
  %950 = vdwg.mxu0
  %v951 = vrcp.pop %v902
  %v952 = vmul.f32 1.0, %v951
  %v953 = vmul.f32 %v946, %v952
  %954 = vxpose.xlu0.b32.start [1/16] %v230, 128
  %955 = vxpose.xlu0.b32.cont [2/16] 0.0, 128
  %956 = vxpose.xlu0.b32.cont [3/16] 0.0, 128
  %957 = vxpose.xlu0.b32.cont [4/16] 0.0, 128
  %958 = vxpose.xlu0.b32.cont [5/16] 0.0, 128
  %959 = vxpose.xlu0.b32.cont [6/16] 0.0, 128
  %960 = vxpose.xlu0.b32.cont [7/16] 0.0, 128
  %961 = vxpose.xlu0.b32.cont [8/16] 0.0, 128
  %962 = vxpose.xlu0.b32.cont [9/16] 0.0, 128
  %963 = vxpose.xlu0.b32.cont [10/16] 0.0, 128
  %964 = vxpose.xlu0.b32.cont [11/16] 0.0, 128
  %965 = vxpose.xlu0.b32.cont [12/16] 0.0, 128
  %966 = vxpose.xlu0.b32.cont [13/16] 0.0, 128
  %967 = vxpose.xlu0.b32.cont [14/16] 0.0, 128
  %968 = vxpose.xlu0.b32.cont [15/16] 0.0, 128
  %969 = vxpose.xlu0.b32.end [16/16] 0.0, 128
  %v970 = vpop.trf.xlu0
  %v971 = vpop.trf.xlu0
  %v972 = vpop.trf.xlu0
  %v973 = vpop.trf.xlu0
  %v974 = vpop.trf.xlu0
  %v975 = vpop.trf.xlu0
  %v976 = vpop.trf.xlu0
  %v977 = vpop.trf.xlu0
  %v978 = vpop.trf.xlu0
  %v979 = vpop.trf.xlu0
  %v980 = vpop.trf.xlu0
  %v981 = vpop.trf.xlu0
  %v982 = vpop.trf.xlu0
  %v983 = vpop.trf.xlu0
  %v984 = vpop.trf.xlu0
  %v985 = vpop.trf.xlu0
  %v986 = vpack.c.bf16 %v971, %v970
  %v987 = vpack.c.bf16 %v973, %v972
  %v988 = vpack.c.bf16 %v975, %v974
  %v989 = vpack.c.bf16 %v977, %v976
  %v990 = vpack.c.bf16 %v214, %v214
  %v992 = vsel %vm286, %v986, 0
  %v995 = vsel %vm286, %v987, 0
  %v998 = vsel %vm286, %v988, 0
  %v1001 = vsel %vm286, %v989, 0
  %v1004 = vsel %vm299, %v990, 0
  %1006 = vmatprep.subr.bf16.mxu0 0
  %1007 = vmatpush1.bf16.msra.mxu0 0
  %1008 = vmatprep.subr.bf16.mxu0 0
  %1009 = vmatpush1.bf16.msra.mxu0 0
  %1010 = vmatprep.subr.bf16.mxu0 0
  %1011 = vmatpush1.bf16.msra.mxu0 0
  %1012 = vmatprep.subr.bf16.mxu0 0
  %1013 = vmatpush1.bf16.msra.mxu0 0
  %1014 = vmatprep.subr.bf16.mxu0 0
  %1015 = vmatpush1.bf16.msra.mxu0 0
  %1016 = vmatprep.subr.bf16.mxu0 0
  %1017 = vmatpush1.bf16.msra.mxu0 0
  %1018 = vmatprep.subr.bf16.mxu0 0
  %1019 = vmatpush1.bf16.msra.mxu0 0
  %1020 = vmatprep.subr.bf16.mxu0 0
  %1021 = vmatpush1.bf16.msra.mxu0 %v1004
  %1022 = vmatprep.subr.bf16.mxu0 0
  %1023 = vmatpush2.bf16.msra.mxu0 0
  %1024 = vmatprep.subr.bf16.mxu0 0
  %1025 = vmatpush2.bf16.msra.mxu0 0
  %1026 = vmatprep.subr.bf16.mxu0 0
  %1027 = vmatpush2.bf16.msra.mxu0 0
  %1028 = vmatprep.subr.bf16.mxu0 0
  %1029 = vmatpush2.bf16.msra.mxu0 0
  %1030 = vmatprep.subr.bf16.mxu0 0
  %1031 = vmatpush2.bf16.msra.mxu0 0
  %1032 = vmatprep.subr.bf16.mxu0 0
  %1033 = vmatpush2.bf16.msra.mxu0 0
  %1034 = vmatprep.subr.bf16.mxu0 0
  %1035 = vmatpush2.bf16.msra.mxu0 0
  %1036 = vmatprep.subr.bf16.mxu0 0
  %1037 = vmatpush2.bf16.msra.mxu0 0
  %1038 = vmatprep.mubr.bf16.mxu0 0
  %1039 = vmatmul.mubr.bf16.gmra.mxu0 %v992
  %v1040 = vpop.f32.mrf.mxu0
  %v1041 = vadd.f32 0.0, %v1040
  %v1042 = vpop.f32.mrf.mxu0
  %v1043 = vpop.f32.mrf.mxu0
  %v1044 = vadd.f32 0.0, %v1043
  %v1045 = vpop.f32.mrf.mxu0
  %1046 = vmatprep.mubr.bf16.mxu0 0
  %1047 = vmatmul.mubr.bf16.gmra.mxu0 %v995
  %v1048 = vpop.f32.mrf.mxu0
  %v1049 = vadd.f32 0.0, %v1048
  %v1050 = vpop.f32.mrf.mxu0
  %v1051 = vpop.f32.mrf.mxu0
  %v1052 = vadd.f32 0.0, %v1051
  %v1053 = vpop.f32.mrf.mxu0
  %1054 = vmatprep.mubr.bf16.mxu0 0
  %1055 = vmatmul.mubr.bf16.gmra.mxu0 %v998
  %v1056 = vpop.f32.mrf.mxu0
  %v1057 = vadd.f32 0.0, %v1056
  %v1058 = vpop.f32.mrf.mxu0
  %v1059 = vpop.f32.mrf.mxu0
  %v1060 = vadd.f32 0.0, %v1059
  %v1061 = vpop.f32.mrf.mxu0
  %1062 = vmatprep.mubr.bf16.mxu0 0
  %1063 = vmatmul.mubr.bf16.gmra.mxu0 %v1001
  %v1064 = vpop.f32.mrf.mxu0
  %v1065 = vadd.f32 0.0, %v1064
  %v1066 = vpop.f32.mrf.mxu0
  %v1067 = vpop.f32.mrf.mxu0
  %v1068 = vadd.f32 0.0, %v1067
  %v1069 = vpop.f32.mrf.mxu0
  %1070 = vdwg.mxu0
  %v1071 = vsel %vm368, %v1041, -inf
  %v1072 = vsel %vm368, %v1044, -inf
  %v1073 = vsel %vm368, %v1049, -inf
  %v1074 = vsel %vm368, %v1052, -inf
  %v1075 = vsel %vm368, %v1057, -inf
  %v1076 = vmax.f32 %v1071, %v1075
  %v1077 = vsel %vm368, %v1060, -inf
  %v1078 = vmax.f32 %v1072, %v1077
  %v1079 = vsel %vm368, %v1065, -inf
  %v1080 = vmax.f32 %v1073, %v1079
  %v1081 = vsel %vm368, %v1068, -inf
  %v1082 = vmax.f32 %v1074, %v1081
  %v1083 = vmax.f32 %v1076, %v1078
  %v1084 = vmax.f32 %v1080, %v1082
  %v1085 = vmax.f32 %v1083, %v1084
  %v1086 = vrot.slane %v1085, 4
  %v1087 = vmax.f32 %v1085, %v1086
  %v1088 = vrot.slane %v1087, 2
  %v1089 = vmax.f32 %v1087, %v1088
  %v1090 = vrot.slane %v1089, 1
  %v1091 = vmax.f32 %v1089, %v1090
  %v1092 = vsub.f32 %v1041, %v1091
  %v1093 = vsub.f32 %v1044, %v1091
  %v1094 = vsub.f32 %v1049, %v1091
  %v1095 = vsub.f32 %v1052, %v1091
  %v1096 = vsub.f32 %v1057, %v1091
  %v1097 = vsub.f32 %v1060, %v1091
  %v1098 = vsub.f32 %v1065, %v1091
  %v1099 = vsub.f32 %v1068, %v1091
  %v1100 = vmul.f32 %v1092, 1.442695
  %v1101 = vpow.pop %v1100
  %v1102 = vmul.f32 %v1093, 1.442695
  %v1103 = vpow.pop %v1102
  %v1104 = vmul.f32 %v1094, 1.442695
  %v1105 = vpow.pop %v1104
  %v1106 = vmul.f32 %v1095, 1.442695
  %v1107 = vpow.pop %v1106
  %v1108 = vmul.f32 %v1096, 1.442695
  %v1109 = vpow.pop %v1108
  %v1110 = vmul.f32 %v1097, 1.442695
  %v1111 = vpow.pop %v1110
  %v1112 = vmul.f32 %v1098, 1.442695
  %v1113 = vpow.pop %v1112
  %v1114 = vmul.f32 %v1099, 1.442695
  %v1115 = vpow.pop %v1114
  %v1116 = vsel %vm368, %v1101, 0.0
  %v1117 = vsel %vm368, %v1103, 0.0
  %v1118 = vadd.f32 %v1116, %v1117
  %v1119 = vsel %vm368, %v1105, 0.0
  %v1120 = vadd.f32 %v1118, %v1119
  %v1121 = vsel %vm368, %v1107, 0.0
  %v1122 = vadd.f32 %v1120, %v1121
  %v1123 = vsel %vm368, %v1109, 0.0
  %v1124 = vadd.f32 %v1122, %v1123
  %v1125 = vsel %vm368, %v1111, 0.0
  %v1126 = vadd.f32 %v1124, %v1125
  %v1127 = vsel %vm368, %v1113, 0.0
  %v1128 = vadd.f32 %v1126, %v1127
  %v1129 = vsel %vm368, %v1115, 0.0
  %v1130 = vadd.f32 %v1128, %v1129
  %v1131 = vrot.slane %v1130, 4
  %v1132 = vadd.f32 %v1130, %v1131
  %v1133 = vrot.slane %v1132, 2
  %v1134 = vadd.f32 %v1132, %v1133
  %v1135 = vrot.slane %v1134, 1
  %v1136 = vadd.f32 %v1134, %v1135
  %v1137 = vpack.c.bf16 %v246, %v246
  %v1138 = vpack.c.bf16 %v1103, %v1101
  %v1139 = vpack.c.bf16 %v1107, %v1105
  %v1140 = vpack.c.bf16 %v1111, %v1109
  %v1141 = vpack.c.bf16 %v1115, %v1113
  %v1143 = vsel %vm368, %v1137, 0
  %1145 = vmatprep.subr.bf16.mxu0 0
  %1146 = vmatpush1.bf16.msra.mxu0 0
  %1147 = vmatprep.subr.bf16.mxu0 0
  %1148 = vmatpush1.bf16.msra.mxu0 0
  %1149 = vmatprep.subr.bf16.mxu0 0
  %1150 = vmatpush1.bf16.msra.mxu0 0
  %1151 = vmatprep.subr.bf16.mxu0 0
  %1152 = vmatpush1.bf16.msra.mxu0 0
  %1153 = vmatprep.subr.bf16.mxu0 0
  %1154 = vmatpush1.bf16.msra.mxu0 %v1141
  %1155 = vmatprep.subr.bf16.mxu0 0
  %1156 = vmatpush1.bf16.msra.mxu0 %v1140
  %1157 = vmatprep.subr.bf16.mxu0 0
  %1158 = vmatpush1.bf16.msra.mxu0 %v1139
  %1159 = vmatprep.subr.bf16.mxu0 0
  %1160 = vmatpush1.bf16.msra.mxu0 %v1138
  %1161 = vmatprep.subr.bf16.mxu0 0
  %1162 = vmatpush2.bf16.msra.mxu0 0
  %1163 = vmatprep.subr.bf16.mxu0 0
  %1164 = vmatpush2.bf16.msra.mxu0 0
  %1165 = vmatprep.subr.bf16.mxu0 0
  %1166 = vmatpush2.bf16.msra.mxu0 0
  %1167 = vmatprep.subr.bf16.mxu0 0
  %1168 = vmatpush2.bf16.msra.mxu0 0
  %1169 = vmatprep.subr.bf16.mxu0 0
  %1170 = vmatpush2.bf16.msra.mxu0 0
  %1171 = vmatprep.subr.bf16.mxu0 0
  %1172 = vmatpush2.bf16.msra.mxu0 0
  %1173 = vmatprep.subr.bf16.mxu0 0
  %1174 = vmatpush2.bf16.msra.mxu0 0
  %1175 = vmatprep.subr.bf16.mxu0 0
  %1176 = vmatpush2.bf16.msra.mxu0 0
  %1177 = vmatprep.mubr.bf16.mxu0 0
  %1178 = vmatmul.mubr.bf16.gmra.mxu0 %v1143
  %v1179 = vpop.f32.mrf.mxu0
  %v1180 = vadd.f32 0.0, %v1179
  %v1181 = vpop.f32.mrf.mxu0
  %v1182 = vpop.f32.mrf.mxu0
  %v1183 = vpop.f32.mrf.mxu0
  %1184 = vdwg.mxu0
  %v1185 = vrcp.pop %v1136
  %v1186 = vmul.f32 1.0, %v1185
  %v1187 = vmul.f32 %v1180, %v1186
  %v1188 = vpack.c.bf16 %v719, %v485
  %v1189 = vpack.c.bf16 %v1187, %v953
  %1191 = vset.pattern.permute.xlu0 0
  %1192 = vperm.xlu0 %1191, %v49
  %v1193 = vpop.permute.xlu0 %1192
  %1196 = vset.pattern.permute.xlu0 0
  %1197 = vperm.xlu0 %1196, %v50
  %v1198 = vpop.permute.xlu0 %1197
  %1201 = vset.pattern.permute.xlu0 0
  %1202 = vperm.xlu0 %1201, %v51
  %v1203 = vpop.permute.xlu0 %1202
  %1206 = vset.pattern.permute.xlu0 0
  %1207 = vperm.xlu0 %1206, %v52
  %v1208 = vpop.permute.xlu0 %1207
  %v1214 = vunpack.c.l.b16 %v45
  %v1215 = vunpack.c.l.b16 %v46
  %v1216 = vunpack.c.l.b16 %v47
  %v1217 = vunpack.c.l.b16 %v48
  %v1218 = vpack.c.b16 %v1215, %v1214
  %v1219 = vpack.c.b16 %v1217, %v1216
  %v1221 = vsel %vm149, %v1218, 0
  %v1224 = vsel %vm149, %v1219, 0
  %1226 = vmatprep.subr.bf16.mxu0 0
  %1227 = vmatpush1.bf16.msra.mxu0 0
  %1228 = vmatprep.subr.bf16.mxu0 0
  %1229 = vmatpush1.bf16.msra.mxu0 0
  %1230 = vmatprep.subr.bf16.mxu0 0
  %1231 = vmatpush1.bf16.msra.mxu0 0
  %1232 = vmatprep.subr.bf16.mxu0 0
  %1233 = vmatpush1.bf16.msra.mxu0 0
  %1234 = vmatprep.subr.bf16.mxu0 0
  %1235 = vmatpush1.bf16.msra.mxu0 0
  %1236 = vmatprep.subr.bf16.mxu0 0
  %1237 = vmatpush1.bf16.msra.mxu0 0
  %1238 = vmatprep.subr.bf16.mxu0 0
  %1239 = vmatpush1.bf16.msra.mxu0 %v1189
  %1240 = vmatprep.subr.bf16.mxu0 0
  %1241 = vmatpush1.bf16.msra.mxu0 %v1188
  %1242 = vmatprep.subr.bf16.mxu0 0
  %1243 = vmatpush2.bf16.msra.mxu0 0
  %1244 = vmatprep.subr.bf16.mxu0 0
  %1245 = vmatpush2.bf16.msra.mxu0 0
  %1246 = vmatprep.subr.bf16.mxu0 0
  %1247 = vmatpush2.bf16.msra.mxu0 0
  %1248 = vmatprep.subr.bf16.mxu0 0
  %1249 = vmatpush2.bf16.msra.mxu0 0
  %1250 = vmatprep.subr.bf16.mxu0 0
  %1251 = vmatpush2.bf16.msra.mxu0 0
  %1252 = vmatprep.subr.bf16.mxu0 0
  %1253 = vmatpush2.bf16.msra.mxu0 0
  %1254 = vmatprep.subr.bf16.mxu0 0
  %1255 = vmatpush2.bf16.msra.mxu0 0
  %1256 = vmatprep.subr.bf16.mxu0 0
  %1257 = vmatpush2.bf16.msra.mxu0 0
  %1258 = vmatprep.mubr.bf16.mxu0 0
  %1259 = vmatmul.mubr.bf16.gmra.mxu0 %v1221
  %v1260 = vpop.f32.mrf.mxu0
  %v1261 = vadd.f32 %v1193, %v1260
  %v1262 = vpop.f32.mrf.mxu0
  %v1263 = vpop.f32.mrf.mxu0
  %v1264 = vadd.f32 %v1198, %v1263
  %v1265 = vpop.f32.mrf.mxu0
  %1266 = vmatprep.mubr.bf16.mxu0 0
  %1267 = vmatmul.mubr.bf16.gmra.mxu0 %v1224
  %v1268 = vpop.f32.mrf.mxu0
  %v1269 = vadd.f32 %v1203, %v1268
  %v1270 = vpop.f32.mrf.mxu0
  %v1271 = vpop.f32.mrf.mxu0
  %v1272 = vadd.f32 %v1208, %v1271
  %v1273 = vpop.f32.mrf.mxu0
  %1274 = vdwg.mxu0
  %1275 = vst.msk [vmem:[%s5] sm:$0xff] %vm368, %v1261
  %1276 = vst.msk [vmem:[%s5 + $0x8] sm:$0xff] %vm368, %v1264
  %1277 = vst.msk [vmem:[%s5 + $0x10] sm:$0xff] %vm368, %v1269
  %1278 = vst.msk [vmem:[%s5 + $0x18] sm:$0xff] %vm368, %v1272
  %s1279 = scalar_lea.vmem %s0, 32
  %v1280 = vld [vmem:[%s1279] sm:$0xff]
  %v1281 = vld [vmem:[%s1279 + $0x8] sm:$0xff]
  %v1282 = vld [vmem:[%s1279 + $0x10] sm:$0xff]
  %v1283 = vld [vmem:[%s1279 + $0x18] sm:$0xff]
  %v1284 = vpack.c.bf16 %v1281, %v1280
  %v1285 = vpack.c.bf16 %v1283, %v1282
  %1286 = vmatprep.subr.bf16.mxu0 0
  %1287 = vmatpush1.bf16.msra.mxu0 0
  %1288 = vmatprep.subr.bf16.mxu0 0
  %1289 = vmatpush1.bf16.msra.mxu0 0
  %1290 = vmatprep.subr.bf16.mxu0 0
  %1291 = vmatpush1.bf16.msra.mxu0 0
  %1292 = vmatprep.subr.bf16.mxu0 0
  %1293 = vmatpush1.bf16.msra.mxu0 0
  %1294 = vmatprep.subr.bf16.mxu0 0
  %1295 = vmatpush1.bf16.msra.mxu0 0
  %1296 = vmatprep.subr.bf16.mxu0 0
  %1297 = vmatpush1.bf16.msra.mxu0 0
  %1298 = vmatprep.subr.bf16.mxu0 0
  %1299 = vmatpush1.bf16.msra.mxu0 %v1285
  %1300 = vmatprep.subr.bf16.mxu0 0
  %1301 = vmatpush1.bf16.msra.mxu0 %v1284
  %1302 = vmatprep.subr.bf16.mxu0 0
  %1303 = vmatpush2.bf16.msra.mxu0 0
  %1304 = vmatprep.subr.bf16.mxu0 0
  %1305 = vmatpush2.bf16.msra.mxu0 0
  %1306 = vmatprep.subr.bf16.mxu0 0
  %1307 = vmatpush2.bf16.msra.mxu0 0
  %1308 = vmatprep.subr.bf16.mxu0 0
  %1309 = vmatpush2.bf16.msra.mxu0 0
  %1310 = vmatprep.subr.bf16.mxu0 0
  %1311 = vmatpush2.bf16.msra.mxu0 0
  %1312 = vmatprep.subr.bf16.mxu0 0
  %1313 = vmatpush2.bf16.msra.mxu0 0
  %1314 = vmatprep.subr.bf16.mxu0 0
  %1315 = vmatpush2.bf16.msra.mxu0 0
  %1316 = vmatprep.subr.bf16.mxu0 0
  %1317 = vmatpush2.bf16.msra.mxu0 0
  %1318 = vmatprep.mubr.bf16.mxu0 0
  %1319 = vmatmul.mubr.bf16.gmra.mxu0 %v151
  %v1320 = vpop.f32.mrf.mxu0
  %v1321 = vadd.f32 %v62, %v1320
  %v1322 = vpop.f32.mrf.mxu0
  %v1323 = vpop.f32.mrf.mxu0
  %v1324 = vadd.f32 %v67, %v1323
  %v1325 = vpop.f32.mrf.mxu0
  %1326 = vmatprep.mubr.bf16.mxu0 0
  %1327 = vmatmul.mubr.bf16.gmra.mxu0 %v154
  %v1328 = vpop.f32.mrf.mxu0
  %v1329 = vadd.f32 %v72, %v1328
  %v1330 = vpop.f32.mrf.mxu0
  %v1331 = vpop.f32.mrf.mxu0
  %v1332 = vadd.f32 %v77, %v1331
  %v1333 = vpop.f32.mrf.mxu0
  %1334 = vmatprep.mubr.bf16.mxu0 0
  %1335 = vmatmul.mubr.bf16.gmra.mxu0 %v157
  %v1336 = vpop.f32.mrf.mxu0
  %v1337 = vadd.f32 %v82, %v1336
  %v1338 = vpop.f32.mrf.mxu0
  %v1339 = vpop.f32.mrf.mxu0
  %v1340 = vadd.f32 %v87, %v1339
  %v1341 = vpop.f32.mrf.mxu0
  %1342 = vmatprep.mubr.bf16.mxu0 0
  %1343 = vmatmul.mubr.bf16.gmra.mxu0 %v160
  %v1344 = vpop.f32.mrf.mxu0
  %v1345 = vadd.f32 %v92, %v1344
  %v1346 = vpop.f32.mrf.mxu0
  %v1347 = vpop.f32.mrf.mxu0
  %v1348 = vadd.f32 %v97, %v1347
  %v1349 = vpop.f32.mrf.mxu0
  %1350 = vmatprep.mubr.bf16.mxu0 0
  %1351 = vmatmul.mubr.bf16.gmra.mxu0 %v163
  %v1352 = vpop.f32.mrf.mxu0
  %v1353 = vadd.f32 %v102, %v1352
  %v1354 = vpop.f32.mrf.mxu0
  %v1355 = vpop.f32.mrf.mxu0
  %v1356 = vadd.f32 %v107, %v1355
  %v1357 = vpop.f32.mrf.mxu0
  %1358 = vmatprep.mubr.bf16.mxu0 0
  %1359 = vmatmul.mubr.bf16.gmra.mxu0 %v166
  %v1360 = vpop.f32.mrf.mxu0
  %v1361 = vadd.f32 %v112, %v1360
  %v1362 = vpop.f32.mrf.mxu0
  %v1363 = vpop.f32.mrf.mxu0
  %v1364 = vadd.f32 %v117, %v1363
  %v1365 = vpop.f32.mrf.mxu0
  %1366 = vdwg.mxu0
  %1367 = vxpose.xlu0.b32.start [1/16] %v1337, 128
  %1368 = vxpose.xlu0.b32.cont [2/16] 0.0, 128
  %1369 = vxpose.xlu0.b32.cont [3/16] 0.0, 128
  %1370 = vxpose.xlu0.b32.cont [4/16] 0.0, 128
  %1371 = vxpose.xlu0.b32.cont [5/16] 0.0, 128
  %1372 = vxpose.xlu0.b32.cont [6/16] 0.0, 128
  %1373 = vxpose.xlu0.b32.cont [7/16] 0.0, 128
  %1374 = vxpose.xlu0.b32.cont [8/16] 0.0, 128
  %1375 = vxpose.xlu0.b32.cont [9/16] 0.0, 128
  %1376 = vxpose.xlu0.b32.cont [10/16] 0.0, 128
  %1377 = vxpose.xlu0.b32.cont [11/16] 0.0, 128
  %1378 = vxpose.xlu0.b32.cont [12/16] 0.0, 128
  %1379 = vxpose.xlu0.b32.cont [13/16] 0.0, 128
  %1380 = vxpose.xlu0.b32.cont [14/16] 0.0, 128
  %1381 = vxpose.xlu0.b32.cont [15/16] 0.0, 128
  %1382 = vxpose.xlu0.b32.end [16/16] 0.0, 128
  %v1383 = vpop.trf.xlu0
  %v1384 = vpop.trf.xlu0
  %v1385 = vpop.trf.xlu0
  %v1386 = vpop.trf.xlu0
  %v1387 = vpop.trf.xlu0
  %v1388 = vpop.trf.xlu0
  %v1389 = vpop.trf.xlu0
  %v1390 = vpop.trf.xlu0
  %v1391 = vpop.trf.xlu0
  %v1392 = vpop.trf.xlu0
  %v1393 = vpop.trf.xlu0
  %v1394 = vpop.trf.xlu0
  %v1395 = vpop.trf.xlu0
  %v1396 = vpop.trf.xlu0
  %v1397 = vpop.trf.xlu0
  %v1398 = vpop.trf.xlu0
  %v1399 = vpack.c.bf16 %v1384, %v1383
  %v1400 = vpack.c.bf16 %v1386, %v1385
  %v1401 = vpack.c.bf16 %v1388, %v1387
  %v1402 = vpack.c.bf16 %v1390, %v1389
  %v1403 = vpack.c.bf16 %v1321, %v1321
  %v1405 = vsel %vm286, %v1399, 0
  %v1408 = vsel %vm286, %v1400, 0
  %v1411 = vsel %vm286, %v1401, 0
  %v1414 = vsel %vm286, %v1402, 0
  %v1417 = vsel %vm299, %v1403, 0
  %1419 = vmatprep.subr.bf16.mxu0 0
  %1420 = vmatpush1.bf16.msra.mxu0 0
  %1421 = vmatprep.subr.bf16.mxu0 0
  %1422 = vmatpush1.bf16.msra.mxu0 0
  %1423 = vmatprep.subr.bf16.mxu0 0
  %1424 = vmatpush1.bf16.msra.mxu0 0
  %1425 = vmatprep.subr.bf16.mxu0 0
  %1426 = vmatpush1.bf16.msra.mxu0 0
  %1427 = vmatprep.subr.bf16.mxu0 0
  %1428 = vmatpush1.bf16.msra.mxu0 0
  %1429 = vmatprep.subr.bf16.mxu0 0
  %1430 = vmatpush1.bf16.msra.mxu0 0
  %1431 = vmatprep.subr.bf16.mxu0 0
  %1432 = vmatpush1.bf16.msra.mxu0 0
  %1433 = vmatprep.subr.bf16.mxu0 0
  %1434 = vmatpush1.bf16.msra.mxu0 %v1417
  %1435 = vmatprep.subr.bf16.mxu0 0
  %1436 = vmatpush2.bf16.msra.mxu0 0
  %1437 = vmatprep.subr.bf16.mxu0 0
  %1438 = vmatpush2.bf16.msra.mxu0 0
  %1439 = vmatprep.subr.bf16.mxu0 0
  %1440 = vmatpush2.bf16.msra.mxu0 0
  %1441 = vmatprep.subr.bf16.mxu0 0
  %1442 = vmatpush2.bf16.msra.mxu0 0
  %1443 = vmatprep.subr.bf16.mxu0 0
  %1444 = vmatpush2.bf16.msra.mxu0 0
  %1445 = vmatprep.subr.bf16.mxu0 0
  %1446 = vmatpush2.bf16.msra.mxu0 0
  %1447 = vmatprep.subr.bf16.mxu0 0
  %1448 = vmatpush2.bf16.msra.mxu0 0
  %1449 = vmatprep.subr.bf16.mxu0 0
  %1450 = vmatpush2.bf16.msra.mxu0 0
  %1451 = vmatprep.mubr.bf16.mxu0 0
  %1452 = vmatmul.mubr.bf16.gmra.mxu0 %v1405
  %v1453 = vpop.f32.mrf.mxu0
  %v1454 = vadd.f32 0.0, %v1453
  %v1455 = vpop.f32.mrf.mxu0
  %v1456 = vpop.f32.mrf.mxu0
  %v1457 = vadd.f32 0.0, %v1456
  %v1458 = vpop.f32.mrf.mxu0
  %1459 = vmatprep.mubr.bf16.mxu0 0
  %1460 = vmatmul.mubr.bf16.gmra.mxu0 %v1408
  %v1461 = vpop.f32.mrf.mxu0
  %v1462 = vadd.f32 0.0, %v1461
  %v1463 = vpop.f32.mrf.mxu0
  %v1464 = vpop.f32.mrf.mxu0
  %v1465 = vadd.f32 0.0, %v1464
  %v1466 = vpop.f32.mrf.mxu0
  %1467 = vmatprep.mubr.bf16.mxu0 0
  %1468 = vmatmul.mubr.bf16.gmra.mxu0 %v1411
  %v1469 = vpop.f32.mrf.mxu0
  %v1470 = vadd.f32 0.0, %v1469
  %v1471 = vpop.f32.mrf.mxu0
  %v1472 = vpop.f32.mrf.mxu0
  %v1473 = vadd.f32 0.0, %v1472
  %v1474 = vpop.f32.mrf.mxu0
  %1475 = vmatprep.mubr.bf16.mxu0 0
  %1476 = vmatmul.mubr.bf16.gmra.mxu0 %v1414
  %v1477 = vpop.f32.mrf.mxu0
  %v1478 = vadd.f32 0.0, %v1477
  %v1479 = vpop.f32.mrf.mxu0
  %v1480 = vpop.f32.mrf.mxu0
  %v1481 = vadd.f32 0.0, %v1480
  %v1482 = vpop.f32.mrf.mxu0
  %1483 = vdwg.mxu0
  %v1484 = vsel %vm368, %v1454, -inf
  %v1485 = vsel %vm368, %v1457, -inf
  %v1486 = vsel %vm368, %v1462, -inf
  %v1487 = vsel %vm368, %v1465, -inf
  %v1488 = vsel %vm368, %v1470, -inf
  %v1489 = vmax.f32 %v1484, %v1488
  %v1490 = vsel %vm368, %v1473, -inf
  %v1491 = vmax.f32 %v1485, %v1490
  %v1492 = vsel %vm368, %v1478, -inf
  %v1493 = vmax.f32 %v1486, %v1492
  %v1494 = vsel %vm368, %v1481, -inf
  %v1495 = vmax.f32 %v1487, %v1494
  %v1496 = vmax.f32 %v1489, %v1491
  %v1497 = vmax.f32 %v1493, %v1495
  %v1498 = vmax.f32 %v1496, %v1497
  %v1499 = vrot.slane %v1498, 4
  %v1500 = vmax.f32 %v1498, %v1499
  %v1501 = vrot.slane %v1500, 2
  %v1502 = vmax.f32 %v1500, %v1501
  %v1503 = vrot.slane %v1502, 1
  %v1504 = vmax.f32 %v1502, %v1503
  %v1505 = vsub.f32 %v1454, %v1504
  %v1506 = vsub.f32 %v1457, %v1504
  %v1507 = vsub.f32 %v1462, %v1504
  %v1508 = vsub.f32 %v1465, %v1504
  %v1509 = vsub.f32 %v1470, %v1504
  %v1510 = vsub.f32 %v1473, %v1504
  %v1511 = vsub.f32 %v1478, %v1504
  %v1512 = vsub.f32 %v1481, %v1504
  %v1513 = vmul.f32 %v1505, 1.442695
  %v1514 = vpow.pop %v1513
  %v1515 = vmul.f32 %v1506, 1.442695
  %v1516 = vpow.pop %v1515
  %v1517 = vmul.f32 %v1507, 1.442695
  %v1518 = vpow.pop %v1517
  %v1519 = vmul.f32 %v1508, 1.442695
  %v1520 = vpow.pop %v1519
  %v1521 = vmul.f32 %v1509, 1.442695
  %v1522 = vpow.pop %v1521
  %v1523 = vmul.f32 %v1510, 1.442695
  %v1524 = vpow.pop %v1523
  %v1525 = vmul.f32 %v1511, 1.442695
  %v1526 = vpow.pop %v1525
  %v1527 = vmul.f32 %v1512, 1.442695
  %v1528 = vpow.pop %v1527
  %v1529 = vsel %vm368, %v1514, 0.0
  %v1530 = vsel %vm368, %v1516, 0.0
  %v1531 = vadd.f32 %v1529, %v1530
  %v1532 = vsel %vm368, %v1518, 0.0
  %v1533 = vadd.f32 %v1531, %v1532
  %v1534 = vsel %vm368, %v1520, 0.0
  %v1535 = vadd.f32 %v1533, %v1534
  %v1536 = vsel %vm368, %v1522, 0.0
  %v1537 = vadd.f32 %v1535, %v1536
  %v1538 = vsel %vm368, %v1524, 0.0
  %v1539 = vadd.f32 %v1537, %v1538
  %v1540 = vsel %vm368, %v1526, 0.0
  %v1541 = vadd.f32 %v1539, %v1540
  %v1542 = vsel %vm368, %v1528, 0.0
  %v1543 = vadd.f32 %v1541, %v1542
  %v1544 = vrot.slane %v1543, 4
  %v1545 = vadd.f32 %v1543, %v1544
  %v1546 = vrot.slane %v1545, 2
  %v1547 = vadd.f32 %v1545, %v1546
  %v1548 = vrot.slane %v1547, 1
  %v1549 = vadd.f32 %v1547, %v1548
  %v1550 = vpack.c.bf16 %v1353, %v1353
  %v1551 = vpack.c.bf16 %v1516, %v1514
  %v1552 = vpack.c.bf16 %v1520, %v1518
  %v1553 = vpack.c.bf16 %v1524, %v1522
  %v1554 = vpack.c.bf16 %v1528, %v1526
  %v1556 = vsel %vm368, %v1550, 0
  %1558 = vmatprep.subr.bf16.mxu0 0
  %1559 = vmatpush1.bf16.msra.mxu0 0
  %1560 = vmatprep.subr.bf16.mxu0 0
  %1561 = vmatpush1.bf16.msra.mxu0 0
  %1562 = vmatprep.subr.bf16.mxu0 0
  %1563 = vmatpush1.bf16.msra.mxu0 0
  %1564 = vmatprep.subr.bf16.mxu0 0
  %1565 = vmatpush1.bf16.msra.mxu0 0
  %1566 = vmatprep.subr.bf16.mxu0 0
  %1567 = vmatpush1.bf16.msra.mxu0 %v1554
  %1568 = vmatprep.subr.bf16.mxu0 0
  %1569 = vmatpush1.bf16.msra.mxu0 %v1553
  %1570 = vmatprep.subr.bf16.mxu0 0
  %1571 = vmatpush1.bf16.msra.mxu0 %v1552
  %1572 = vmatprep.subr.bf16.mxu0 0
  %1573 = vmatpush1.bf16.msra.mxu0 %v1551
  %1574 = vmatprep.subr.bf16.mxu0 0
  %1575 = vmatpush2.bf16.msra.mxu0 0
  %1576 = vmatprep.subr.bf16.mxu0 0
  %1577 = vmatpush2.bf16.msra.mxu0 0
  %1578 = vmatprep.subr.bf16.mxu0 0
  %1579 = vmatpush2.bf16.msra.mxu0 0
  %1580 = vmatprep.subr.bf16.mxu0 0
  %1581 = vmatpush2.bf16.msra.mxu0 0
  %1582 = vmatprep.subr.bf16.mxu0 0
  %1583 = vmatpush2.bf16.msra.mxu0 0
  %1584 = vmatprep.subr.bf16.mxu0 0
  %1585 = vmatpush2.bf16.msra.mxu0 0
  %1586 = vmatprep.subr.bf16.mxu0 0
  %1587 = vmatpush2.bf16.msra.mxu0 0
  %1588 = vmatprep.subr.bf16.mxu0 0
  %1589 = vmatpush2.bf16.msra.mxu0 0
  %1590 = vmatprep.mubr.bf16.mxu0 0
  %1591 = vmatmul.mubr.bf16.gmra.mxu0 %v1556
  %v1592 = vpop.f32.mrf.mxu0
  %v1593 = vadd.f32 0.0, %v1592
  %v1594 = vpop.f32.mrf.mxu0
  %v1595 = vpop.f32.mrf.mxu0
  %v1596 = vpop.f32.mrf.mxu0
  %1597 = vdwg.mxu0
  %v1598 = vrcp.pop %v1549
  %v1599 = vmul.f32 1.0, %v1598
  %v1600 = vmul.f32 %v1593, %v1599
  %1601 = vxpose.xlu0.b32.start [1/16] %v1340, 128
  %1602 = vxpose.xlu0.b32.cont [2/16] 0.0, 128
  %1603 = vxpose.xlu0.b32.cont [3/16] 0.0, 128
  %1604 = vxpose.xlu0.b32.cont [4/16] 0.0, 128
  %1605 = vxpose.xlu0.b32.cont [5/16] 0.0, 128
  %1606 = vxpose.xlu0.b32.cont [6/16] 0.0, 128
  %1607 = vxpose.xlu0.b32.cont [7/16] 0.0, 128
  %1608 = vxpose.xlu0.b32.cont [8/16] 0.0, 128
  %1609 = vxpose.xlu0.b32.cont [9/16] 0.0, 128
  %1610 = vxpose.xlu0.b32.cont [10/16] 0.0, 128
  %1611 = vxpose.xlu0.b32.cont [11/16] 0.0, 128
  %1612 = vxpose.xlu0.b32.cont [12/16] 0.0, 128
  %1613 = vxpose.xlu0.b32.cont [13/16] 0.0, 128
  %1614 = vxpose.xlu0.b32.cont [14/16] 0.0, 128
  %1615 = vxpose.xlu0.b32.cont [15/16] 0.0, 128
  %1616 = vxpose.xlu0.b32.end [16/16] 0.0, 128
  %v1617 = vpop.trf.xlu0
  %v1618 = vpop.trf.xlu0
  %v1619 = vpop.trf.xlu0
  %v1620 = vpop.trf.xlu0
  %v1621 = vpop.trf.xlu0
  %v1622 = vpop.trf.xlu0
  %v1623 = vpop.trf.xlu0
  %v1624 = vpop.trf.xlu0
  %v1625 = vpop.trf.xlu0
  %v1626 = vpop.trf.xlu0
  %v1627 = vpop.trf.xlu0
  %v1628 = vpop.trf.xlu0
  %v1629 = vpop.trf.xlu0
  %v1630 = vpop.trf.xlu0
  %v1631 = vpop.trf.xlu0
  %v1632 = vpop.trf.xlu0
  %v1633 = vpack.c.bf16 %v1618, %v1617
  %v1634 = vpack.c.bf16 %v1620, %v1619
  %v1635 = vpack.c.bf16 %v1622, %v1621
  %v1636 = vpack.c.bf16 %v1624, %v1623
  %v1637 = vpack.c.bf16 %v1324, %v1324
  %v1639 = vsel %vm286, %v1633, 0
  %v1642 = vsel %vm286, %v1634, 0
  %v1645 = vsel %vm286, %v1635, 0
  %v1648 = vsel %vm286, %v1636, 0
  %v1651 = vsel %vm299, %v1637, 0
  %1653 = vmatprep.subr.bf16.mxu0 0
  %1654 = vmatpush1.bf16.msra.mxu0 0
  %1655 = vmatprep.subr.bf16.mxu0 0
  %1656 = vmatpush1.bf16.msra.mxu0 0
  %1657 = vmatprep.subr.bf16.mxu0 0
  %1658 = vmatpush1.bf16.msra.mxu0 0
  %1659 = vmatprep.subr.bf16.mxu0 0
  %1660 = vmatpush1.bf16.msra.mxu0 0
  %1661 = vmatprep.subr.bf16.mxu0 0
  %1662 = vmatpush1.bf16.msra.mxu0 0
  %1663 = vmatprep.subr.bf16.mxu0 0
  %1664 = vmatpush1.bf16.msra.mxu0 0
  %1665 = vmatprep.subr.bf16.mxu0 0
  %1666 = vmatpush1.bf16.msra.mxu0 0
  %1667 = vmatprep.subr.bf16.mxu0 0
  %1668 = vmatpush1.bf16.msra.mxu0 %v1651
  %1669 = vmatprep.subr.bf16.mxu0 0
  %1670 = vmatpush2.bf16.msra.mxu0 0
  %1671 = vmatprep.subr.bf16.mxu0 0
  %1672 = vmatpush2.bf16.msra.mxu0 0
  %1673 = vmatprep.subr.bf16.mxu0 0
  %1674 = vmatpush2.bf16.msra.mxu0 0
  %1675 = vmatprep.subr.bf16.mxu0 0
  %1676 = vmatpush2.bf16.msra.mxu0 0
  %1677 = vmatprep.subr.bf16.mxu0 0
  %1678 = vmatpush2.bf16.msra.mxu0 0
  %1679 = vmatprep.subr.bf16.mxu0 0
  %1680 = vmatpush2.bf16.msra.mxu0 0
  %1681 = vmatprep.subr.bf16.mxu0 0
  %1682 = vmatpush2.bf16.msra.mxu0 0
  %1683 = vmatprep.subr.bf16.mxu0 0
  %1684 = vmatpush2.bf16.msra.mxu0 0
  %1685 = vmatprep.mubr.bf16.mxu0 0
  %1686 = vmatmul.mubr.bf16.gmra.mxu0 %v1639
  %v1687 = vpop.f32.mrf.mxu0
  %v1688 = vadd.f32 0.0, %v1687
  %v1689 = vpop.f32.mrf.mxu0
  %v1690 = vpop.f32.mrf.mxu0
  %v1691 = vadd.f32 0.0, %v1690
  %v1692 = vpop.f32.mrf.mxu0
  %1693 = vmatprep.mubr.bf16.mxu0 0
  %1694 = vmatmul.mubr.bf16.gmra.mxu0 %v1642
  %v1695 = vpop.f32.mrf.mxu0
  %v1696 = vadd.f32 0.0, %v1695
  %v1697 = vpop.f32.mrf.mxu0
  %v1698 = vpop.f32.mrf.mxu0
  %v1699 = vadd.f32 0.0, %v1698
  %v1700 = vpop.f32.mrf.mxu0
  %1701 = vmatprep.mubr.bf16.mxu0 0
  %1702 = vmatmul.mubr.bf16.gmra.mxu0 %v1645
  %v1703 = vpop.f32.mrf.mxu0
  %v1704 = vadd.f32 0.0, %v1703
  %v1705 = vpop.f32.mrf.mxu0
  %v1706 = vpop.f32.mrf.mxu0
  %v1707 = vadd.f32 0.0, %v1706
  %v1708 = vpop.f32.mrf.mxu0
  %1709 = vmatprep.mubr.bf16.mxu0 0
  %1710 = vmatmul.mubr.bf16.gmra.mxu0 %v1648
  %v1711 = vpop.f32.mrf.mxu0
  %v1712 = vadd.f32 0.0, %v1711
  %v1713 = vpop.f32.mrf.mxu0
  %v1714 = vpop.f32.mrf.mxu0
  %v1715 = vadd.f32 0.0, %v1714
  %v1716 = vpop.f32.mrf.mxu0
  %1717 = vdwg.mxu0
  %v1718 = vsel %vm368, %v1688, -inf
  %v1719 = vsel %vm368, %v1691, -inf
  %v1720 = vsel %vm368, %v1696, -inf
  %v1721 = vsel %vm368, %v1699, -inf
  %v1722 = vsel %vm368, %v1704, -inf
  %v1723 = vmax.f32 %v1718, %v1722
  %v1724 = vsel %vm368, %v1707, -inf
  %v1725 = vmax.f32 %v1719, %v1724
  %v1726 = vsel %vm368, %v1712, -inf
  %v1727 = vmax.f32 %v1720, %v1726
  %v1728 = vsel %vm368, %v1715, -inf
  %v1729 = vmax.f32 %v1721, %v1728
  %v1730 = vmax.f32 %v1723, %v1725
  %v1731 = vmax.f32 %v1727, %v1729
  %v1732 = vmax.f32 %v1730, %v1731
  %v1733 = vrot.slane %v1732, 4
  %v1734 = vmax.f32 %v1732, %v1733
  %v1735 = vrot.slane %v1734, 2
  %v1736 = vmax.f32 %v1734, %v1735
  %v1737 = vrot.slane %v1736, 1
  %v1738 = vmax.f32 %v1736, %v1737
  %v1739 = vsub.f32 %v1688, %v1738
  %v1740 = vsub.f32 %v1691, %v1738
  %v1741 = vsub.f32 %v1696, %v1738
  %v1742 = vsub.f32 %v1699, %v1738
  %v1743 = vsub.f32 %v1704, %v1738
  %v1744 = vsub.f32 %v1707, %v1738
  %v1745 = vsub.f32 %v1712, %v1738
  %v1746 = vsub.f32 %v1715, %v1738
  %v1747 = vmul.f32 %v1739, 1.442695
  %v1748 = vpow.pop %v1747
  %v1749 = vmul.f32 %v1740, 1.442695
  %v1750 = vpow.pop %v1749
  %v1751 = vmul.f32 %v1741, 1.442695
  %v1752 = vpow.pop %v1751
  %v1753 = vmul.f32 %v1742, 1.442695
  %v1754 = vpow.pop %v1753
  %v1755 = vmul.f32 %v1743, 1.442695
  %v1756 = vpow.pop %v1755
  %v1757 = vmul.f32 %v1744, 1.442695
  %v1758 = vpow.pop %v1757
  %v1759 = vmul.f32 %v1745, 1.442695
  %v1760 = vpow.pop %v1759
  %v1761 = vmul.f32 %v1746, 1.442695
  %v1762 = vpow.pop %v1761
  %v1763 = vsel %vm368, %v1748, 0.0
  %v1764 = vsel %vm368, %v1750, 0.0
  %v1765 = vadd.f32 %v1763, %v1764
  %v1766 = vsel %vm368, %v1752, 0.0
  %v1767 = vadd.f32 %v1765, %v1766
  %v1768 = vsel %vm368, %v1754, 0.0
  %v1769 = vadd.f32 %v1767, %v1768
  %v1770 = vsel %vm368, %v1756, 0.0
  %v1771 = vadd.f32 %v1769, %v1770
  %v1772 = vsel %vm368, %v1758, 0.0
  %v1773 = vadd.f32 %v1771, %v1772
  %v1774 = vsel %vm368, %v1760, 0.0
  %v1775 = vadd.f32 %v1773, %v1774
  %v1776 = vsel %vm368, %v1762, 0.0
  %v1777 = vadd.f32 %v1775, %v1776
  %v1778 = vrot.slane %v1777, 4
  %v1779 = vadd.f32 %v1777, %v1778
  %v1780 = vrot.slane %v1779, 2
  %v1781 = vadd.f32 %v1779, %v1780
  %v1782 = vrot.slane %v1781, 1
  %v1783 = vadd.f32 %v1781, %v1782
  %v1784 = vpack.c.bf16 %v1356, %v1356
  %v1785 = vpack.c.bf16 %v1750, %v1748
  %v1786 = vpack.c.bf16 %v1754, %v1752
  %v1787 = vpack.c.bf16 %v1758, %v1756
  %v1788 = vpack.c.bf16 %v1762, %v1760
  %v1790 = vsel %vm368, %v1784, 0
  %1792 = vmatprep.subr.bf16.mxu0 0
  %1793 = vmatpush1.bf16.msra.mxu0 0
  %1794 = vmatprep.subr.bf16.mxu0 0
  %1795 = vmatpush1.bf16.msra.mxu0 0
  %1796 = vmatprep.subr.bf16.mxu0 0
  %1797 = vmatpush1.bf16.msra.mxu0 0
  %1798 = vmatprep.subr.bf16.mxu0 0
  %1799 = vmatpush1.bf16.msra.mxu0 0
  %1800 = vmatprep.subr.bf16.mxu0 0
  %1801 = vmatpush1.bf16.msra.mxu0 %v1788
  %1802 = vmatprep.subr.bf16.mxu0 0
  %1803 = vmatpush1.bf16.msra.mxu0 %v1787
  %1804 = vmatprep.subr.bf16.mxu0 0
  %1805 = vmatpush1.bf16.msra.mxu0 %v1786
  %1806 = vmatprep.subr.bf16.mxu0 0
  %1807 = vmatpush1.bf16.msra.mxu0 %v1785
  %1808 = vmatprep.subr.bf16.mxu0 0
  %1809 = vmatpush2.bf16.msra.mxu0 0
  %1810 = vmatprep.subr.bf16.mxu0 0
  %1811 = vmatpush2.bf16.msra.mxu0 0
  %1812 = vmatprep.subr.bf16.mxu0 0
  %1813 = vmatpush2.bf16.msra.mxu0 0
  %1814 = vmatprep.subr.bf16.mxu0 0
  %1815 = vmatpush2.bf16.msra.mxu0 0
  %1816 = vmatprep.subr.bf16.mxu0 0
  %1817 = vmatpush2.bf16.msra.mxu0 0
  %1818 = vmatprep.subr.bf16.mxu0 0
  %1819 = vmatpush2.bf16.msra.mxu0 0
  %1820 = vmatprep.subr.bf16.mxu0 0
  %1821 = vmatpush2.bf16.msra.mxu0 0
  %1822 = vmatprep.subr.bf16.mxu0 0
  %1823 = vmatpush2.bf16.msra.mxu0 0
  %1824 = vmatprep.mubr.bf16.mxu0 0
  %1825 = vmatmul.mubr.bf16.gmra.mxu0 %v1790
  %v1826 = vpop.f32.mrf.mxu0
  %v1827 = vadd.f32 0.0, %v1826
  %v1828 = vpop.f32.mrf.mxu0
  %v1829 = vpop.f32.mrf.mxu0
  %v1830 = vpop.f32.mrf.mxu0
  %1831 = vdwg.mxu0
  %v1832 = vrcp.pop %v1783
  %v1833 = vmul.f32 1.0, %v1832
  %v1834 = vmul.f32 %v1827, %v1833
  %1835 = vxpose.xlu0.b32.start [1/16] %v1345, 128
  %1836 = vxpose.xlu0.b32.cont [2/16] 0.0, 128
  %1837 = vxpose.xlu0.b32.cont [3/16] 0.0, 128
  %1838 = vxpose.xlu0.b32.cont [4/16] 0.0, 128
  %1839 = vxpose.xlu0.b32.cont [5/16] 0.0, 128
  %1840 = vxpose.xlu0.b32.cont [6/16] 0.0, 128
  %1841 = vxpose.xlu0.b32.cont [7/16] 0.0, 128
  %1842 = vxpose.xlu0.b32.cont [8/16] 0.0, 128
  %1843 = vxpose.xlu0.b32.cont [9/16] 0.0, 128
  %1844 = vxpose.xlu0.b32.cont [10/16] 0.0, 128
  %1845 = vxpose.xlu0.b32.cont [11/16] 0.0, 128
  %1846 = vxpose.xlu0.b32.cont [12/16] 0.0, 128
  %1847 = vxpose.xlu0.b32.cont [13/16] 0.0, 128
  %1848 = vxpose.xlu0.b32.cont [14/16] 0.0, 128
  %1849 = vxpose.xlu0.b32.cont [15/16] 0.0, 128
  %1850 = vxpose.xlu0.b32.end [16/16] 0.0, 128
  %v1851 = vpop.trf.xlu0
  %v1852 = vpop.trf.xlu0
  %v1853 = vpop.trf.xlu0
  %v1854 = vpop.trf.xlu0
  %v1855 = vpop.trf.xlu0
  %v1856 = vpop.trf.xlu0
  %v1857 = vpop.trf.xlu0
  %v1858 = vpop.trf.xlu0
  %v1859 = vpop.trf.xlu0
  %v1860 = vpop.trf.xlu0
  %v1861 = vpop.trf.xlu0
  %v1862 = vpop.trf.xlu0
  %v1863 = vpop.trf.xlu0
  %v1864 = vpop.trf.xlu0
  %v1865 = vpop.trf.xlu0
  %v1866 = vpop.trf.xlu0
  %v1867 = vpack.c.bf16 %v1852, %v1851
  %v1868 = vpack.c.bf16 %v1854, %v1853
  %v1869 = vpack.c.bf16 %v1856, %v1855
  %v1870 = vpack.c.bf16 %v1858, %v1857
  %v1871 = vpack.c.bf16 %v1329, %v1329
  %v1873 = vsel %vm286, %v1867, 0
  %v1876 = vsel %vm286, %v1868, 0
  %v1879 = vsel %vm286, %v1869, 0
  %v1882 = vsel %vm286, %v1870, 0
  %v1885 = vsel %vm299, %v1871, 0
  %1887 = vmatprep.subr.bf16.mxu0 0
  %1888 = vmatpush1.bf16.msra.mxu0 0
  %1889 = vmatprep.subr.bf16.mxu0 0
  %1890 = vmatpush1.bf16.msra.mxu0 0
  %1891 = vmatprep.subr.bf16.mxu0 0
  %1892 = vmatpush1.bf16.msra.mxu0 0
  %1893 = vmatprep.subr.bf16.mxu0 0
  %1894 = vmatpush1.bf16.msra.mxu0 0
  %1895 = vmatprep.subr.bf16.mxu0 0
  %1896 = vmatpush1.bf16.msra.mxu0 0
  %1897 = vmatprep.subr.bf16.mxu0 0
  %1898 = vmatpush1.bf16.msra.mxu0 0
  %1899 = vmatprep.subr.bf16.mxu0 0
  %1900 = vmatpush1.bf16.msra.mxu0 0
  %1901 = vmatprep.subr.bf16.mxu0 0
  %1902 = vmatpush1.bf16.msra.mxu0 %v1885
  %1903 = vmatprep.subr.bf16.mxu0 0
  %1904 = vmatpush2.bf16.msra.mxu0 0
  %1905 = vmatprep.subr.bf16.mxu0 0
  %1906 = vmatpush2.bf16.msra.mxu0 0
  %1907 = vmatprep.subr.bf16.mxu0 0
  %1908 = vmatpush2.bf16.msra.mxu0 0
  %1909 = vmatprep.subr.bf16.mxu0 0
  %1910 = vmatpush2.bf16.msra.mxu0 0
  %1911 = vmatprep.subr.bf16.mxu0 0
  %1912 = vmatpush2.bf16.msra.mxu0 0
  %1913 = vmatprep.subr.bf16.mxu0 0
  %1914 = vmatpush2.bf16.msra.mxu0 0
  %1915 = vmatprep.subr.bf16.mxu0 0
  %1916 = vmatpush2.bf16.msra.mxu0 0
  %1917 = vmatprep.subr.bf16.mxu0 0
  %1918 = vmatpush2.bf16.msra.mxu0 0
  %1919 = vmatprep.mubr.bf16.mxu0 0
  %1920 = vmatmul.mubr.bf16.gmra.mxu0 %v1873
  %v1921 = vpop.f32.mrf.mxu0
  %v1922 = vadd.f32 0.0, %v1921
  %v1923 = vpop.f32.mrf.mxu0
  %v1924 = vpop.f32.mrf.mxu0
  %v1925 = vadd.f32 0.0, %v1924
  %v1926 = vpop.f32.mrf.mxu0
  %1927 = vmatprep.mubr.bf16.mxu0 0
  %1928 = vmatmul.mubr.bf16.gmra.mxu0 %v1876
  %v1929 = vpop.f32.mrf.mxu0
  %v1930 = vadd.f32 0.0, %v1929
  %v1931 = vpop.f32.mrf.mxu0
  %v1932 = vpop.f32.mrf.mxu0
  %v1933 = vadd.f32 0.0, %v1932
  %v1934 = vpop.f32.mrf.mxu0
  %1935 = vmatprep.mubr.bf16.mxu0 0
  %1936 = vmatmul.mubr.bf16.gmra.mxu0 %v1879
  %v1937 = vpop.f32.mrf.mxu0
  %v1938 = vadd.f32 0.0, %v1937
  %v1939 = vpop.f32.mrf.mxu0
  %v1940 = vpop.f32.mrf.mxu0
  %v1941 = vadd.f32 0.0, %v1940
  %v1942 = vpop.f32.mrf.mxu0
  %1943 = vmatprep.mubr.bf16.mxu0 0
  %1944 = vmatmul.mubr.bf16.gmra.mxu0 %v1882
  %v1945 = vpop.f32.mrf.mxu0
  %v1946 = vadd.f32 0.0, %v1945
  %v1947 = vpop.f32.mrf.mxu0
  %v1948 = vpop.f32.mrf.mxu0
  %v1949 = vadd.f32 0.0, %v1948
  %v1950 = vpop.f32.mrf.mxu0
  %1951 = vdwg.mxu0
  %v1952 = vsel %vm368, %v1922, -inf
  %v1953 = vsel %vm368, %v1925, -inf
  %v1954 = vsel %vm368, %v1930, -inf
  %v1955 = vsel %vm368, %v1933, -inf
  %v1956 = vsel %vm368, %v1938, -inf
  %v1957 = vmax.f32 %v1952, %v1956
  %v1958 = vsel %vm368, %v1941, -inf
  %v1959 = vmax.f32 %v1953, %v1958
  %v1960 = vsel %vm368, %v1946, -inf
  %v1961 = vmax.f32 %v1954, %v1960
  %v1962 = vsel %vm368, %v1949, -inf
  %v1963 = vmax.f32 %v1955, %v1962
  %v1964 = vmax.f32 %v1957, %v1959
  %v1965 = vmax.f32 %v1961, %v1963
  %v1966 = vmax.f32 %v1964, %v1965
  %v1967 = vrot.slane %v1966, 4
  %v1968 = vmax.f32 %v1966, %v1967
  %v1969 = vrot.slane %v1968, 2
  %v1970 = vmax.f32 %v1968, %v1969
  %v1971 = vrot.slane %v1970, 1
  %v1972 = vmax.f32 %v1970, %v1971
  %v1973 = vsub.f32 %v1922, %v1972
  %v1974 = vsub.f32 %v1925, %v1972
  %v1975 = vsub.f32 %v1930, %v1972
  %v1976 = vsub.f32 %v1933, %v1972
  %v1977 = vsub.f32 %v1938, %v1972
  %v1978 = vsub.f32 %v1941, %v1972
  %v1979 = vsub.f32 %v1946, %v1972
  %v1980 = vsub.f32 %v1949, %v1972
  %v1981 = vmul.f32 %v1973, 1.442695
  %v1982 = vpow.pop %v1981
  %v1983 = vmul.f32 %v1974, 1.442695
  %v1984 = vpow.pop %v1983
  %v1985 = vmul.f32 %v1975, 1.442695
  %v1986 = vpow.pop %v1985
  %v1987 = vmul.f32 %v1976, 1.442695
  %v1988 = vpow.pop %v1987
  %v1989 = vmul.f32 %v1977, 1.442695
  %v1990 = vpow.pop %v1989
  %v1991 = vmul.f32 %v1978, 1.442695
  %v1992 = vpow.pop %v1991
  %v1993 = vmul.f32 %v1979, 1.442695
  %v1994 = vpow.pop %v1993
  %v1995 = vmul.f32 %v1980, 1.442695
  %v1996 = vpow.pop %v1995
  %v1997 = vsel %vm368, %v1982, 0.0
  %v1998 = vsel %vm368, %v1984, 0.0
  %v1999 = vadd.f32 %v1997, %v1998
  %v2000 = vsel %vm368, %v1986, 0.0
  %v2001 = vadd.f32 %v1999, %v2000
  %v2002 = vsel %vm368, %v1988, 0.0
  %v2003 = vadd.f32 %v2001, %v2002
  %v2004 = vsel %vm368, %v1990, 0.0
  %v2005 = vadd.f32 %v2003, %v2004
  %v2006 = vsel %vm368, %v1992, 0.0
  %v2007 = vadd.f32 %v2005, %v2006
  %v2008 = vsel %vm368, %v1994, 0.0
  %v2009 = vadd.f32 %v2007, %v2008
  %v2010 = vsel %vm368, %v1996, 0.0
  %v2011 = vadd.f32 %v2009, %v2010
  %v2012 = vrot.slane %v2011, 4
  %v2013 = vadd.f32 %v2011, %v2012
  %v2014 = vrot.slane %v2013, 2
  %v2015 = vadd.f32 %v2013, %v2014
  %v2016 = vrot.slane %v2015, 1
  %v2017 = vadd.f32 %v2015, %v2016
  %v2018 = vpack.c.bf16 %v1361, %v1361
  %v2019 = vpack.c.bf16 %v1984, %v1982
  %v2020 = vpack.c.bf16 %v1988, %v1986
  %v2021 = vpack.c.bf16 %v1992, %v1990
  %v2022 = vpack.c.bf16 %v1996, %v1994
  %v2024 = vsel %vm368, %v2018, 0
  %2026 = vmatprep.subr.bf16.mxu0 0
  %2027 = vmatpush1.bf16.msra.mxu0 0
  %2028 = vmatprep.subr.bf16.mxu0 0
  %2029 = vmatpush1.bf16.msra.mxu0 0
  %2030 = vmatprep.subr.bf16.mxu0 0
  %2031 = vmatpush1.bf16.msra.mxu0 0
  %2032 = vmatprep.subr.bf16.mxu0 0
  %2033 = vmatpush1.bf16.msra.mxu0 0
  %2034 = vmatprep.subr.bf16.mxu0 0
  %2035 = vmatpush1.bf16.msra.mxu0 %v2022
  %2036 = vmatprep.subr.bf16.mxu0 0
  %2037 = vmatpush1.bf16.msra.mxu0 %v2021
  %2038 = vmatprep.subr.bf16.mxu0 0
  %2039 = vmatpush1.bf16.msra.mxu0 %v2020
  %2040 = vmatprep.subr.bf16.mxu0 0
  %2041 = vmatpush1.bf16.msra.mxu0 %v2019
  %2042 = vmatprep.subr.bf16.mxu0 0
  %2043 = vmatpush2.bf16.msra.mxu0 0
  %2044 = vmatprep.subr.bf16.mxu0 0
  %2045 = vmatpush2.bf16.msra.mxu0 0
  %2046 = vmatprep.subr.bf16.mxu0 0
  %2047 = vmatpush2.bf16.msra.mxu0 0
  %2048 = vmatprep.subr.bf16.mxu0 0
  %2049 = vmatpush2.bf16.msra.mxu0 0
  %2050 = vmatprep.subr.bf16.mxu0 0
  %2051 = vmatpush2.bf16.msra.mxu0 0
  %2052 = vmatprep.subr.bf16.mxu0 0
  %2053 = vmatpush2.bf16.msra.mxu0 0
  %2054 = vmatprep.subr.bf16.mxu0 0
  %2055 = vmatpush2.bf16.msra.mxu0 0
  %2056 = vmatprep.subr.bf16.mxu0 0
  %2057 = vmatpush2.bf16.msra.mxu0 0
  %2058 = vmatprep.mubr.bf16.mxu0 0
  %2059 = vmatmul.mubr.bf16.gmra.mxu0 %v2024
  %v2060 = vpop.f32.mrf.mxu0
  %v2061 = vadd.f32 0.0, %v2060
  %v2062 = vpop.f32.mrf.mxu0
  %v2063 = vpop.f32.mrf.mxu0
  %v2064 = vpop.f32.mrf.mxu0
  %2065 = vdwg.mxu0
  %v2066 = vrcp.pop %v2017
  %v2067 = vmul.f32 1.0, %v2066
  %v2068 = vmul.f32 %v2061, %v2067
  %2069 = vxpose.xlu0.b32.start [1/16] %v1348, 128
  %2070 = vxpose.xlu0.b32.cont [2/16] 0.0, 128
  %2071 = vxpose.xlu0.b32.cont [3/16] 0.0, 128
  %2072 = vxpose.xlu0.b32.cont [4/16] 0.0, 128
  %2073 = vxpose.xlu0.b32.cont [5/16] 0.0, 128
  %2074 = vxpose.xlu0.b32.cont [6/16] 0.0, 128
  %2075 = vxpose.xlu0.b32.cont [7/16] 0.0, 128
  %2076 = vxpose.xlu0.b32.cont [8/16] 0.0, 128
  %2077 = vxpose.xlu0.b32.cont [9/16] 0.0, 128
  %2078 = vxpose.xlu0.b32.cont [10/16] 0.0, 128
  %2079 = vxpose.xlu0.b32.cont [11/16] 0.0, 128
  %2080 = vxpose.xlu0.b32.cont [12/16] 0.0, 128
  %2081 = vxpose.xlu0.b32.cont [13/16] 0.0, 128
  %2082 = vxpose.xlu0.b32.cont [14/16] 0.0, 128
  %2083 = vxpose.xlu0.b32.cont [15/16] 0.0, 128
  %2084 = vxpose.xlu0.b32.end [16/16] 0.0, 128
  %v2085 = vpop.trf.xlu0
  %v2086 = vpop.trf.xlu0
  %v2087 = vpop.trf.xlu0
  %v2088 = vpop.trf.xlu0
  %v2089 = vpop.trf.xlu0
  %v2090 = vpop.trf.xlu0
  %v2091 = vpop.trf.xlu0
  %v2092 = vpop.trf.xlu0
  %v2093 = vpop.trf.xlu0
  %v2094 = vpop.trf.xlu0
  %v2095 = vpop.trf.xlu0
  %v2096 = vpop.trf.xlu0
  %v2097 = vpop.trf.xlu0
  %v2098 = vpop.trf.xlu0
  %v2099 = vpop.trf.xlu0
  %v2100 = vpop.trf.xlu0
  %v2101 = vpack.c.bf16 %v2086, %v2085
  %v2102 = vpack.c.bf16 %v2088, %v2087
  %v2103 = vpack.c.bf16 %v2090, %v2089
  %v2104 = vpack.c.bf16 %v2092, %v2091
  %v2105 = vpack.c.bf16 %v1332, %v1332
  %v2107 = vsel %vm286, %v2101, 0
  %v2110 = vsel %vm286, %v2102, 0
  %v2113 = vsel %vm286, %v2103, 0
  %v2116 = vsel %vm286, %v2104, 0
  %v2119 = vsel %vm299, %v2105, 0
  %2121 = vmatprep.subr.bf16.mxu0 0
  %2122 = vmatpush1.bf16.msra.mxu0 0
  %2123 = vmatprep.subr.bf16.mxu0 0
  %2124 = vmatpush1.bf16.msra.mxu0 0
  %2125 = vmatprep.subr.bf16.mxu0 0
  %2126 = vmatpush1.bf16.msra.mxu0 0
  %2127 = vmatprep.subr.bf16.mxu0 0
  %2128 = vmatpush1.bf16.msra.mxu0 0
  %2129 = vmatprep.subr.bf16.mxu0 0
  %2130 = vmatpush1.bf16.msra.mxu0 0
  %2131 = vmatprep.subr.bf16.mxu0 0
  %2132 = vmatpush1.bf16.msra.mxu0 0
  %2133 = vmatprep.subr.bf16.mxu0 0
  %2134 = vmatpush1.bf16.msra.mxu0 0
  %2135 = vmatprep.subr.bf16.mxu0 0
  %2136 = vmatpush1.bf16.msra.mxu0 %v2119
  %2137 = vmatprep.subr.bf16.mxu0 0
  %2138 = vmatpush2.bf16.msra.mxu0 0
  %2139 = vmatprep.subr.bf16.mxu0 0
  %2140 = vmatpush2.bf16.msra.mxu0 0
  %2141 = vmatprep.subr.bf16.mxu0 0
  %2142 = vmatpush2.bf16.msra.mxu0 0
  %2143 = vmatprep.subr.bf16.mxu0 0
  %2144 = vmatpush2.bf16.msra.mxu0 0
  %2145 = vmatprep.subr.bf16.mxu0 0
  %2146 = vmatpush2.bf16.msra.mxu0 0
  %2147 = vmatprep.subr.bf16.mxu0 0
  %2148 = vmatpush2.bf16.msra.mxu0 0
  %2149 = vmatprep.subr.bf16.mxu0 0
  %2150 = vmatpush2.bf16.msra.mxu0 0
  %2151 = vmatprep.subr.bf16.mxu0 0
  %2152 = vmatpush2.bf16.msra.mxu0 0
  %2153 = vmatprep.mubr.bf16.mxu0 0
  %2154 = vmatmul.mubr.bf16.gmra.mxu0 %v2107
  %v2155 = vpop.f32.mrf.mxu0
  %v2156 = vadd.f32 0.0, %v2155
  %v2157 = vpop.f32.mrf.mxu0
  %v2158 = vpop.f32.mrf.mxu0
  %v2159 = vadd.f32 0.0, %v2158
  %v2160 = vpop.f32.mrf.mxu0
  %2161 = vmatprep.mubr.bf16.mxu0 0
  %2162 = vmatmul.mubr.bf16.gmra.mxu0 %v2110
  %v2163 = vpop.f32.mrf.mxu0
  %v2164 = vadd.f32 0.0, %v2163
  %v2165 = vpop.f32.mrf.mxu0
  %v2166 = vpop.f32.mrf.mxu0
  %v2167 = vadd.f32 0.0, %v2166
  %v2168 = vpop.f32.mrf.mxu0
  %2169 = vmatprep.mubr.bf16.mxu0 0
  %2170 = vmatmul.mubr.bf16.gmra.mxu0 %v2113
  %v2171 = vpop.f32.mrf.mxu0
  %v2172 = vadd.f32 0.0, %v2171
  %v2173 = vpop.f32.mrf.mxu0
  %v2174 = vpop.f32.mrf.mxu0
  %v2175 = vadd.f32 0.0, %v2174
  %v2176 = vpop.f32.mrf.mxu0
  %2177 = vmatprep.mubr.bf16.mxu0 0
  %2178 = vmatmul.mubr.bf16.gmra.mxu0 %v2116
  %v2179 = vpop.f32.mrf.mxu0
  %v2180 = vadd.f32 0.0, %v2179
  %v2181 = vpop.f32.mrf.mxu0
  %v2182 = vpop.f32.mrf.mxu0
  %v2183 = vadd.f32 0.0, %v2182
  %v2184 = vpop.f32.mrf.mxu0
  %2185 = vdwg.mxu0
  %v2186 = vsel %vm368, %v2156, -inf
  %v2187 = vsel %vm368, %v2159, -inf
  %v2188 = vsel %vm368, %v2164, -inf
  %v2189 = vsel %vm368, %v2167, -inf
  %v2190 = vsel %vm368, %v2172, -inf
  %v2191 = vmax.f32 %v2186, %v2190
  %v2192 = vsel %vm368, %v2175, -inf
  %v2193 = vmax.f32 %v2187, %v2192
  %v2194 = vsel %vm368, %v2180, -inf
  %v2195 = vmax.f32 %v2188, %v2194
  %v2196 = vsel %vm368, %v2183, -inf
  %v2197 = vmax.f32 %v2189, %v2196
  %v2198 = vmax.f32 %v2191, %v2193
  %v2199 = vmax.f32 %v2195, %v2197
  %v2200 = vmax.f32 %v2198, %v2199
  %v2201 = vrot.slane %v2200, 4
  %v2202 = vmax.f32 %v2200, %v2201
  %v2203 = vrot.slane %v2202, 2
  %v2204 = vmax.f32 %v2202, %v2203
  %v2205 = vrot.slane %v2204, 1
  %v2206 = vmax.f32 %v2204, %v2205
  %v2207 = vsub.f32 %v2156, %v2206
  %v2208 = vsub.f32 %v2159, %v2206
  %v2209 = vsub.f32 %v2164, %v2206
  %v2210 = vsub.f32 %v2167, %v2206
  %v2211 = vsub.f32 %v2172, %v2206
  %v2212 = vsub.f32 %v2175, %v2206
  %v2213 = vsub.f32 %v2180, %v2206
  %v2214 = vsub.f32 %v2183, %v2206
  %v2215 = vmul.f32 %v2207, 1.442695
  %v2216 = vpow.pop %v2215
  %v2217 = vmul.f32 %v2208, 1.442695
  %v2218 = vpow.pop %v2217
  %v2219 = vmul.f32 %v2209, 1.442695
  %v2220 = vpow.pop %v2219
  %v2221 = vmul.f32 %v2210, 1.442695
  %v2222 = vpow.pop %v2221
  %v2223 = vmul.f32 %v2211, 1.442695
  %v2224 = vpow.pop %v2223
  %v2225 = vmul.f32 %v2212, 1.442695
  %v2226 = vpow.pop %v2225
  %v2227 = vmul.f32 %v2213, 1.442695
  %v2228 = vpow.pop %v2227
  %v2229 = vmul.f32 %v2214, 1.442695
  %v2230 = vpow.pop %v2229
  %v2231 = vsel %vm368, %v2216, 0.0
  %v2232 = vsel %vm368, %v2218, 0.0
  %v2233 = vadd.f32 %v2231, %v2232
  %v2234 = vsel %vm368, %v2220, 0.0
  %v2235 = vadd.f32 %v2233, %v2234
  %v2236 = vsel %vm368, %v2222, 0.0
  %v2237 = vadd.f32 %v2235, %v2236
  %v2238 = vsel %vm368, %v2224, 0.0
  %v2239 = vadd.f32 %v2237, %v2238
  %v2240 = vsel %vm368, %v2226, 0.0
  %v2241 = vadd.f32 %v2239, %v2240
  %v2242 = vsel %vm368, %v2228, 0.0
  %v2243 = vadd.f32 %v2241, %v2242
  %v2244 = vsel %vm368, %v2230, 0.0
  %v2245 = vadd.f32 %v2243, %v2244
  %v2246 = vrot.slane %v2245, 4
  %v2247 = vadd.f32 %v2245, %v2246
  %v2248 = vrot.slane %v2247, 2
  %v2249 = vadd.f32 %v2247, %v2248
  %v2250 = vrot.slane %v2249, 1
  %v2251 = vadd.f32 %v2249, %v2250
  %v2252 = vpack.c.bf16 %v1364, %v1364
  %v2253 = vpack.c.bf16 %v2218, %v2216
  %v2254 = vpack.c.bf16 %v2222, %v2220
  %v2255 = vpack.c.bf16 %v2226, %v2224
  %v2256 = vpack.c.bf16 %v2230, %v2228
  %v2258 = vsel %vm368, %v2252, 0
  %2260 = vmatprep.subr.bf16.mxu0 0
  %2261 = vmatpush1.bf16.msra.mxu0 0
  %2262 = vmatprep.subr.bf16.mxu0 0
  %2263 = vmatpush1.bf16.msra.mxu0 0
  %2264 = vmatprep.subr.bf16.mxu0 0
  %2265 = vmatpush1.bf16.msra.mxu0 0
  %2266 = vmatprep.subr.bf16.mxu0 0
  %2267 = vmatpush1.bf16.msra.mxu0 0
  %2268 = vmatprep.subr.bf16.mxu0 0
  %2269 = vmatpush1.bf16.msra.mxu0 %v2256
  %2270 = vmatprep.subr.bf16.mxu0 0
  %2271 = vmatpush1.bf16.msra.mxu0 %v2255
  %2272 = vmatprep.subr.bf16.mxu0 0
  %2273 = vmatpush1.bf16.msra.mxu0 %v2254
  %2274 = vmatprep.subr.bf16.mxu0 0
  %2275 = vmatpush1.bf16.msra.mxu0 %v2253
  %2276 = vmatprep.subr.bf16.mxu0 0
  %2277 = vmatpush2.bf16.msra.mxu0 0
  %2278 = vmatprep.subr.bf16.mxu0 0
  %2279 = vmatpush2.bf16.msra.mxu0 0
  %2280 = vmatprep.subr.bf16.mxu0 0
  %2281 = vmatpush2.bf16.msra.mxu0 0
  %2282 = vmatprep.subr.bf16.mxu0 0
  %2283 = vmatpush2.bf16.msra.mxu0 0
  %2284 = vmatprep.subr.bf16.mxu0 0
  %2285 = vmatpush2.bf16.msra.mxu0 0
  %2286 = vmatprep.subr.bf16.mxu0 0
  %2287 = vmatpush2.bf16.msra.mxu0 0
  %2288 = vmatprep.subr.bf16.mxu0 0
  %2289 = vmatpush2.bf16.msra.mxu0 0
  %2290 = vmatprep.subr.bf16.mxu0 0
  %2291 = vmatpush2.bf16.msra.mxu0 0
  %2292 = vmatprep.mubr.bf16.mxu0 0
  %2293 = vmatmul.mubr.bf16.gmra.mxu0 %v2258
  %v2294 = vpop.f32.mrf.mxu0
  %v2295 = vadd.f32 0.0, %v2294
  %v2296 = vpop.f32.mrf.mxu0
  %v2297 = vpop.f32.mrf.mxu0
  %v2298 = vpop.f32.mrf.mxu0
  %2299 = vdwg.mxu0
  %v2300 = vrcp.pop %v2251
  %v2301 = vmul.f32 1.0, %v2300
  %v2302 = vmul.f32 %v2295, %v2301
  %v2303 = vpack.c.bf16 %v1834, %v1600
  %v2304 = vpack.c.bf16 %v2302, %v2068
  %2305 = vmatprep.subr.bf16.mxu0 0
  %2306 = vmatpush1.bf16.msra.mxu0 0
  %2307 = vmatprep.subr.bf16.mxu0 0
  %2308 = vmatpush1.bf16.msra.mxu0 0
  %2309 = vmatprep.subr.bf16.mxu0 0
  %2310 = vmatpush1.bf16.msra.mxu0 0
  %2311 = vmatprep.subr.bf16.mxu0 0
  %2312 = vmatpush1.bf16.msra.mxu0 0
  %2313 = vmatprep.subr.bf16.mxu0 0
  %2314 = vmatpush1.bf16.msra.mxu0 0
  %2315 = vmatprep.subr.bf16.mxu0 0
  %2316 = vmatpush1.bf16.msra.mxu0 0
  %2317 = vmatprep.subr.bf16.mxu0 0
  %2318 = vmatpush1.bf16.msra.mxu0 %v2304
  %2319 = vmatprep.subr.bf16.mxu0 0
  %2320 = vmatpush1.bf16.msra.mxu0 %v2303
  %2321 = vmatprep.subr.bf16.mxu0 0
  %2322 = vmatpush2.bf16.msra.mxu0 0
  %2323 = vmatprep.subr.bf16.mxu0 0
  %2324 = vmatpush2.bf16.msra.mxu0 0
  %2325 = vmatprep.subr.bf16.mxu0 0
  %2326 = vmatpush2.bf16.msra.mxu0 0
  %2327 = vmatprep.subr.bf16.mxu0 0
  %2328 = vmatpush2.bf16.msra.mxu0 0
  %2329 = vmatprep.subr.bf16.mxu0 0
  %2330 = vmatpush2.bf16.msra.mxu0 0
  %2331 = vmatprep.subr.bf16.mxu0 0
  %2332 = vmatpush2.bf16.msra.mxu0 0
  %2333 = vmatprep.subr.bf16.mxu0 0
  %2334 = vmatpush2.bf16.msra.mxu0 0
  %2335 = vmatprep.subr.bf16.mxu0 0
  %2336 = vmatpush2.bf16.msra.mxu0 0
  %2337 = vmatprep.mubr.bf16.mxu0 0
  %2338 = vmatmul.mubr.bf16.gmra.mxu0 %v1221
  %v2339 = vpop.f32.mrf.mxu0
  %v2340 = vadd.f32 %v1193, %v2339
  %v2341 = vpop.f32.mrf.mxu0
  %v2342 = vpop.f32.mrf.mxu0
  %v2343 = vadd.f32 %v1198, %v2342
  %v2344 = vpop.f32.mrf.mxu0
  %2345 = vmatprep.mubr.bf16.mxu0 0
  %2346 = vmatmul.mubr.bf16.gmra.mxu0 %v1224
  %v2347 = vpop.f32.mrf.mxu0
  %v2348 = vadd.f32 %v1203, %v2347
  %v2349 = vpop.f32.mrf.mxu0
  %v2350 = vpop.f32.mrf.mxu0
  %v2351 = vadd.f32 %v1208, %v2350
  %v2352 = vpop.f32.mrf.mxu0
  %2353 = vdwg.mxu0
  %s2354 = scalar_lea.vmem %s5, 32
  %2355 = vst.msk [vmem:[%s2354] sm:$0xff] %vm368, %v2340
  %2356 = vst.msk [vmem:[%s2354 + $0x8] sm:$0xff] %vm368, %v2343
  %2357 = vst.msk [vmem:[%s2354 + $0x10] sm:$0xff] %vm368, %v2348
  %2358 = vst.msk [vmem:[%s2354 + $0x18] sm:$0xff] %vm368, %v2351
  // Predicated region
  $region22: #{attention_forward.1} parent=0 // pred_check
    _
  $region23: #{attention_forward.1} parent=0 // pred_check_branch
    %2360 = sbr.rel (0) target = $region25
  $region24: #{attention_forward.1} parent=0 // pred_region
    _
  $region25: #{attention_forward.1} parent=0 // pred_fallthru
    _
  // Predicated region
  $region26: #{attention_forward.1} parent=0 // pred_check
    _
  $region27: #{attention_forward.1} parent=0 // pred_check_branch
    %2362 = sbr.rel (0) target = $region29
  $region28: #{attention_forward.1} parent=0 // pred_region
    _
  $region29: #{attention_forward.1} parent=0 // pred_fallthru
    _

</llo_original>
